<compile_context>
chip_gen: v7x
topology: tpu7x:2x2x1
jax: 0.10.0
libtpu: 0.0.40
codegen_flags: <defaults>
</compile_context>

<pallas_src>
import functools

import jax
import jax.numpy as jnp
from jax.experimental import pallas as pl
from jax.experimental.pallas import tpu as pltpu


def _round_up(n, m):
    return ((n + m - 1) // m) * m


def _vhat_kernel(xt_ref, w1t_ref, b1_ref, w2t_ref, b2_ref, w3_ref, b3_ref, o_ref):
    # Activations are transposed: feature dim on sublanes, batch on lanes.
    # Layer 1: H1 = relu(W1^T @ X^T + b1)   -> (H1p, bt), f32 accumulation.
    h1 = jnp.dot(w1t_ref[...], xt_ref[...], preferred_element_type=jnp.float32)
    h1 = jnp.maximum(h1 + b1_ref[...], 0.0)
    # Layer 2: H2 = relu(W2^T @ H1 + b2)    -> (H2p, bt).
    h2 = jnp.dot(w2t_ref[...], h1.astype(w2t_ref.dtype),
                 preferred_element_type=jnp.float32)
    h2 = jnp.maximum(h2 + b2_ref[...], 0.0)
    # Layer 3: Linear(H2, 1).  A 1-wide MXU matmul wastes almost all MXU
    # columns, so use a VPU broadcast-multiply + sublane reduction instead;
    # the result lands directly in the lane-dense (1, bt) layout of the output.
    v = jnp.sum(h2 * w3_ref[...], axis=0, keepdims=True) + b3_ref[0]   # (1, bt)
    o_ref[...] = v[None].astype(o_ref.dtype)                           # (1, 1, bt)


def compute_v_hat(x, params, *, batch_tile=256, compute_dtype=jnp.bfloat16,
                  hidden_pad_multiple=128):
    """x: [B, state_dim] f32, params from init_params -> [B, 1] f32."""
    w1, b1, w2, b2, w3, b3 = params
    B, state_dim = x.shape
    h1, h2 = w1.shape[1], w2.shape[1]
    f32 = jnp.float32

    # ---- pad hidden dims to lane multiples (mathematically exact). ---------
    h1p = _round_up(h1, hidden_pad_multiple)
    h2p = _round_up(h2, hidden_pad_multiple)
    w1t = jnp.zeros((h1p, state_dim), f32).at[:h1, :].set(w1.T).astype(compute_dtype)
    b1c = jnp.zeros((h1p, 1), f32).at[:h1, :].set(b1.reshape(h1, 1))
    w2t = jnp.zeros((h2p, h1p), f32).at[:h2, :h1].set(w2.T).astype(compute_dtype)
    b2c = jnp.zeros((h2p, 1), f32).at[:h2, :].set(b2.reshape(h2, 1))
    w3c = jnp.zeros((h2p, 1), f32).at[:h2, :].set(w3)          # f32 column
    b3s = b3.reshape((1,)).astype(f32)                          # SMEM scalar

    # ---- batch tiling: big lane-aligned tiles; pad B, slice afterwards. ----
    if _round_up(B, 8) <= batch_tile:
        bt = _round_up(B, 8)                        # single grid step, full batch
    else:
        bt = max(128, _round_up(batch_tile, 128))   # multi-step: 128-aligned lanes
    B_pad = _round_up(B, bt)
    n_tiles = B_pad // bt
    x_p = x if B_pad == B else jnp.pad(x, ((0, B_pad - B), (0, 0)))
    x_t = x_p.astype(compute_dtype).T               # (state_dim, B_pad) — layout plumbing

    const = lambda shape: pl.BlockSpec(shape, lambda i: (0, 0))

    out = pl.pallas_call(
        _vhat_kernel,
        out_shape=jax.ShapeDtypeStruct((n_tiles, 1, bt), jnp.float32),
        grid_spec=pltpu.PrefetchScalarGridSpec(
            num_scalar_prefetch=0,
            grid=(n_tiles,),
            in_specs=[
                pl.BlockSpec((state_dim, bt), lambda i: (0, i)),   # X^T tile
                const((h1p, state_dim)),                           # W1^T (resident)
                const((h1p, 1)),                                   # b1 column
                const((h2p, h1p)),                                 # W2^T (resident)
                const((h2p, 1)),                                   # b2 column
                const((h2p, 1)),                                   # w3 column
                pl.BlockSpec(memory_space=pltpu.MemorySpace.SMEM), # b3 scalar
            ],
            # Lane-dense output: one dense (1, bt) row per grid step.
            out_specs=pl.BlockSpec((1, 1, bt), lambda i: (i, 0, 0)),
        ),
        compiler_params=pltpu.CompilerParams(
            # Parallel batch axis -> megacore sharding on v7x; neutral elsewhere.
            dimension_semantics=("parallel",),
        ),
    )(x_t, w1t, b1c, w2t, b2c, w3c, b3s)

    return out.reshape(B_pad, 1)[:B]


def init_params(key, state_dim, h1=400, h2=300):
    """Mimics torch.nn.Linear default init (U[-1/sqrt(fan_in), 1/sqrt(fan_in)]).

    Weights stored as [in_features, out_features] (transpose of PyTorch)."""
    keys = jax.random.split(key, 6)

    def linear(kw, kb, fan_in, fan_out):
        bound = 1.0 / jnp.sqrt(jnp.float32(fan_in))
        w = jax.random.uniform(kw, (fan_in, fan_out), jnp.float32, -bound, bound)
        b = jax.random.uniform(kb, (1, fan_out), jnp.float32, -bound, bound)
        return w, b

    w1, b1 = linear(keys[0], keys[1], state_dim, h1)
    w2, b2 = linear(keys[2], keys[3], h1, h2)
    w3, b3 = linear(keys[4], keys[5], h2, 1)
    return (w1, b1, w2, b2, w3, b3)


def reference_v_hat(x, params):
    w1, b1, w2, b2, w3, b3 = params
    h = jnp.maximum(x @ w1 + b1, 0.0)
    h = jnp.maximum(h @ w2 + b2, 0.0)
    return h @ w3 + b3


def reference_v_hat_bf16(x, params):
    """Same numerics as the kernel: bf16 MXU operands, f32 accumulation."""
    w1, b1, w2, b2, w3, b3 = params
    bf16 = jnp.bfloat16
    h = jnp.dot(x.astype(bf16), w1.astype(bf16), preferred_element_type=jnp.float32)
    h = jnp.maximum(h + b1, 0.0)
    h = jnp.dot(h.astype(bf16), w2.astype(bf16), preferred_element_type=jnp.float32)
    h = jnp.maximum(h + b2, 0.0)
    return jnp.sum(h * w3.reshape(1, -1), axis=-1, keepdims=True) + b3


if __name__ == "__main__":
    key = jax.random.PRNGKey(0)
    k_x1, k_x2, k_p = jax.random.split(key, 3)

    state_dim = 32
    params = init_params(k_p, state_dim)

    # --- small batch (not a tile multiple): single-step fast path -----------
    batch = 20
    x = jax.random.normal(k_x1, (batch, state_dim), jnp.float32)
    fn = jax.jit(functools.partial(compute_v_hat, batch_tile=256))
    out = jax.block_until_ready(fn(x, params))
    assert out.shape == (batch, 1), out.shape
    assert jnp.allclose(out, reference_v_hat_bf16(x, params), atol=2e-3, rtol=2e-3)
    assert jnp.allclose(out, reference_v_hat(x, params), atol=5e-2, rtol=5e-2)

    # --- larger ragged batch: multi-tile grid + batch padding path ----------
    batch2 = 300
    x2 = jax.random.normal(k_x2, (batch2, state_dim), jnp.float32)
    fn2 = jax.jit(functools.partial(compute_v_hat, batch_tile=128))
    out2 = jax.block_until_ready(fn2(x2, params))
    assert out2.shape == (batch2, 1), out2.shape
    assert jnp.allclose(out2, reference_v_hat_bf16(x2, params), atol=2e-3, rtol=2e-3)
    assert jnp.allclose(out2, reference_v_hat(x2, params), atol=5e-2, rtol=5e-2)

    print("KERNEL_OK")
</pallas_src>

<mosaic_0001>
module attributes {stable_mosaic.version = 11 : i64} {
  func.func @_vhat_kernel(%arg0: i32, %arg1: memref<32x24xbf16, #tpu.memory_space<vmem>>, %arg2: memref<512x32xbf16, #tpu.memory_space<vmem>>, %arg3: memref<512x1xf32, #tpu.memory_space<vmem>>, %arg4: memref<384x512xbf16, #tpu.memory_space<vmem>>, %arg5: memref<384x1xf32, #tpu.memory_space<vmem>>, %arg6: memref<384x1xf32, #tpu.memory_space<vmem>>, %arg7: memref<1xf32, #tpu.memory_space<smem>>, %arg8: memref<1x1x24xf32, #tpu.memory_space<vmem>>) attributes {dimension_semantics = [#tpu.dimension_semantics<parallel>], iteration_bounds = array<i64: 1>, scalar_prefetch = 0 : i64, scratch_operands = 0 : i64, tpu.core_type = #tpu.core_type<tc>, window_params = [{transform_indices = @transform_0, window_bounds = array<i64: 32, 24>}, {pipeline_mode = #tpu.pipeline_mode<synchronous>, transform_indices = @transform_1, window_bounds = array<i64: 512, 32>}, {pipeline_mode = #tpu.pipeline_mode<synchronous>, transform_indices = @transform_2, window_bounds = array<i64: 512, 1>}, {pipeline_mode = #tpu.pipeline_mode<synchronous>, transform_indices = @transform_3, window_bounds = array<i64: 384, 512>}, {pipeline_mode = #tpu.pipeline_mode<synchronous>, transform_indices = @transform_4, window_bounds = array<i64: 384, 1>}, {pipeline_mode = #tpu.pipeline_mode<synchronous>, transform_indices = @transform_5, window_bounds = array<i64: 384, 1>}, {transform_indices = @transform_6, window_bounds = array<i64: 1>}, {transform_indices = @transform_7, window_bounds = array<i64: 1, 1, 24>}]} {
    %c0 = arith.constant 0 : index
    %c0_0 = arith.constant 0 : index
    %0 = vector.load %arg2[%c0, %c0_0] : memref<512x32xbf16, #tpu.memory_space<vmem>>, vector<512x32xbf16>
    %c0_1 = arith.constant 0 : index
    %c0_2 = arith.constant 0 : index
    %1 = vector.load %arg1[%c0_1, %c0_2] : memref<32x24xbf16, #tpu.memory_space<vmem>>, vector<32x24xbf16>
    %cst = arith.constant dense<0.000000e+00> : vector<512x24xf32>
    %2 = tpu.matmul %0, %1, %cst {dimension_numbers = #tpu.dot_dimension_numbers<[1], [0], [0], [1], [0, 0, 1, 1], [], []>} : vector<512x32xbf16>, vector<32x24xbf16>, vector<512x24xf32> -> vector<512x24xf32>
    %c0_3 = arith.constant 0 : index
    %c0_4 = arith.constant 0 : index
    %3 = vector.load %arg3[%c0_3, %c0_4] : memref<512x1xf32, #tpu.memory_space<vmem>>, vector<512x1xf32>
    %4 = vector.broadcast %3 : vector<512x1xf32> to vector<512x24xf32>
    %5 = arith.addf %2, %4 : vector<512x24xf32>
    %cst_5 = arith.constant 0.000000e+00 : f32
    %6 = vector.broadcast %cst_5 : f32 to vector<512x24xf32>
    %7 = arith.maximumf %5, %6 : vector<512x24xf32>
    %c0_6 = arith.constant 0 : index
    %c0_7 = arith.constant 0 : index
    %8 = vector.load %arg4[%c0_6, %c0_7] : memref<384x512xbf16, #tpu.memory_space<vmem>>, vector<384x512xbf16>
    %9 = arith.truncf %7 : vector<512x24xf32> to vector<512x24xbf16>
    %cst_8 = arith.constant dense<0.000000e+00> : vector<384x24xf32>
    %10 = tpu.matmul %8, %9, %cst_8 {dimension_numbers = #tpu.dot_dimension_numbers<[1], [0], [0], [1], [0, 0, 1, 1], [], []>} : vector<384x512xbf16>, vector<512x24xbf16>, vector<384x24xf32> -> vector<384x24xf32>
    %c0_9 = arith.constant 0 : index
    %c0_10 = arith.constant 0 : index
    %11 = vector.load %arg5[%c0_9, %c0_10] : memref<384x1xf32, #tpu.memory_space<vmem>>, vector<384x1xf32>
    %12 = vector.broadcast %11 : vector<384x1xf32> to vector<384x24xf32>
    %13 = arith.addf %10, %12 : vector<384x24xf32>
    %cst_11 = arith.constant 0.000000e+00 : f32
    %14 = vector.broadcast %cst_11 : f32 to vector<384x24xf32>
    %15 = arith.maximumf %13, %14 : vector<384x24xf32>
    %c0_12 = arith.constant 0 : index
    %c0_13 = arith.constant 0 : index
    %16 = vector.load %arg6[%c0_12, %c0_13] : memref<384x1xf32, #tpu.memory_space<vmem>>, vector<384x1xf32>
    %17 = vector.broadcast %16 : vector<384x1xf32> to vector<384x24xf32>
    %18 = arith.mulf %15, %17 : vector<384x24xf32>
    %cst_14 = arith.constant dense<0.000000e+00> : vector<24xf32>
    %19 = vector.multi_reduction <add>, %18, %cst_14 [0] : vector<384x24xf32> to vector<24xf32>
    %20 = vector.shape_cast %19 : vector<24xf32> to vector<1x24xf32>
    %c0_15 = arith.constant 0 : index
    %21 = memref.load %arg7[%c0_15] : memref<1xf32, #tpu.memory_space<smem>>
    %22 = vector.broadcast %21 : f32 to vector<1x24xf32>
    %23 = arith.addf %20, %22 : vector<1x24xf32>
    %24 = vector.shape_cast %23 : vector<1x24xf32> to vector<1x1x24xf32>
    %c0_16 = arith.constant 0 : index
    %c0_17 = arith.constant 0 : index
    %c0_18 = arith.constant 0 : index
    %25 = vector.load %arg8[%c0_16, %c0_17, %c0_18] : memref<1x1x24xf32, #tpu.memory_space<vmem>>, vector<1x1x24xf32>
    tpu.vector_store %arg8[%c0_16, %c0_17, %c0_18], %24 {strides = array<i32>} : memref<1x1x24xf32, #tpu.memory_space<vmem>>, vector<1x1x24xf32>,
    return
  }
  func.func @transform_0(%arg0: i32) -> (i32, i32) {
    %c0_i32 = arith.constant 0 : i32
    %c0_i32_0 = arith.constant 0 : i32
    return %c0_i32, %arg0 : i32, i32
  }
  func.func @transform_1(%arg0: i32) -> (i32, i32) {
    %c0_i32 = arith.constant 0 : i32
    %c0_i32_0 = arith.constant 0 : i32
    %c0_i32_1 = arith.constant 0 : i32
    return %c0_i32, %c0_i32_0 : i32, i32
  }
  func.func @transform_2(%arg0: i32) -> (i32, i32) {
    %c0_i32 = arith.constant 0 : i32
    %c0_i32_0 = arith.constant 0 : i32
    %c0_i32_1 = arith.constant 0 : i32
    return %c0_i32, %c0_i32_0 : i32, i32
  }
  func.func @transform_3(%arg0: i32) -> (i32, i32) {
    %c0_i32 = arith.constant 0 : i32
    %c0_i32_0 = arith.constant 0 : i32
    %c0_i32_1 = arith.constant 0 : i32
    return %c0_i32, %c0_i32_0 : i32, i32
  }
  func.func @transform_4(%arg0: i32) -> (i32, i32) {
    %c0_i32 = arith.constant 0 : i32
    %c0_i32_0 = arith.constant 0 : i32
    %c0_i32_1 = arith.constant 0 : i32
    return %c0_i32, %c0_i32_0 : i32, i32
  }
  func.func @transform_5(%arg0: i32) -> (i32, i32) {
    %c0_i32 = arith.constant 0 : i32
    %c0_i32_0 = arith.constant 0 : i32
    %c0_i32_1 = arith.constant 0 : i32
    return %c0_i32, %c0_i32_0 : i32, i32
  }
  func.func @transform_6(%arg0: i32) -> i32 {
    %c0_i32 = arith.constant 0 : i32
    %c0_i32_0 = arith.constant 0 : i32
    return %c0_i32 : i32
  }
  func.func @transform_7(%arg0: i32) -> (i32, i32, i32) {
    %c0_i32 = arith.constant 0 : i32
    %c0_i32_0 = arith.constant 0 : i32
    %c0_i32_1 = arith.constant 0 : i32
    return %arg0, %c0_i32, %c0_i32_0 : i32, i32, i32
  }
}

</mosaic_0001>

<llo_original>
// kernel: compute_v_hat.1
$region0: #{compute_v_hat.1}
  #allocation0 [shape = 'u32[]', space=smem, size = 0x4, offset = 0x4, fixed_abs, tag = 'smem constant byte address 0x4 - core index']
  #allocation1 [shape = 'u32[144,128]{1,0:T(1,128)}', space=vmem, size = 0x12000, scoped, tag = 'internal scratch']
  #allocation2 [shape = 'f32[1]{0:T(128)S(6)}', space=smem, size = 0x200, scoped, tag = 'scoped memory for compute_v_hat.1']
  %s0 = inlined_call_operand.vmem [shape: bf16[32,24], index: 0, kind: input, shape index: {}]
  %s1 = inlined_call_operand.vmem [shape: bf16[512,32], index: 1, kind: input, shape index: {}]
  %s2 = inlined_call_operand.vmem [shape: f32[512,1], index: 2, kind: input, shape index: {}]
  %s3 = inlined_call_operand.vmem [shape: bf16[384,512], index: 3, kind: input, shape index: {}]
  %s4 = inlined_call_operand.vmem [shape: f32[384,1], index: 4, kind: input, shape index: {}]
  %s5 = inlined_call_operand.vmem [shape: f32[384,1], index: 5, kind: input, shape index: {}]
  %s6 = inlined_call_operand.<no memory space> [shape: f32[1], index: 6, kind: input, shape index: {}]
  %s7 = inlined_call_operand.vmem [shape: f32[1,1,24], index: 7, kind: output, shape index: {}]
  %s8 = sld [smem:[#allocation0]]
  $region38: #{compute_v_hat.1} parent=0
    _
  %s10 = ssub.s32 1, %s8
  %s11 = scalar_select 0, %s10, %s8
  %12 = sst [smem:[#allocation2]] %s6
  // Predicated region
  $region2: #{compute_v_hat.1} parent=0 // pred_check
    _
  $region3: #{compute_v_hat.1} parent=0 // pred_check_branch
    %14 = sbr.rel (0) target = $region5
  $region4: #{compute_v_hat.1} parent=0 // pred_region
    _
  $region5: #{compute_v_hat.1} parent=0 // pred_fallthru
    _
  // Predicated region
  $region6: #{compute_v_hat.1} parent=0 // pred_check
    _
  $region7: #{compute_v_hat.1} parent=0 // pred_check_branch
    %16 = sbr.rel (0) target = $region9
  $region8: #{compute_v_hat.1} parent=0 // pred_region
    _
  $region9: #{compute_v_hat.1} parent=0 // pred_fallthru
    _
  // Predicated region
  $region10: #{compute_v_hat.1} parent=0 // pred_check
    _
  $region11: #{compute_v_hat.1} parent=0 // pred_check_branch
    %18 = sbr.rel (0) target = $region13
  $region12: #{compute_v_hat.1} parent=0 // pred_region
    _
  $region13: #{compute_v_hat.1} parent=0 // pred_fallthru
    _
  // Predicated region
  $region14: #{compute_v_hat.1} parent=0 // pred_check
    _
  $region15: #{compute_v_hat.1} parent=0 // pred_check_branch
    %20 = sbr.rel (0) target = $region17
  $region16: #{compute_v_hat.1} parent=0 // pred_region
    _
  $region17: #{compute_v_hat.1} parent=0 // pred_fallthru
    _
  // Predicated region
  $region18: #{compute_v_hat.1} parent=0 // pred_check
    _
  $region19: #{compute_v_hat.1} parent=0 // pred_check_branch
    %22 = sbr.rel (0) target = $region21
  $region20: #{compute_v_hat.1} parent=0 // pred_region
    _
  $region21: #{compute_v_hat.1} parent=0 // pred_fallthru
    _
  // Predicated region
  $region22: #{compute_v_hat.1} parent=0 // pred_check
    _
  $region23: #{compute_v_hat.1} parent=0 // pred_check_branch
    %24 = sbr.rel (0) target = $region25
  $region24: #{compute_v_hat.1} parent=0 // pred_region
    _
  $region25: #{compute_v_hat.1} parent=0 // pred_fallthru
    _
  // Predicated region
  $region26: #{compute_v_hat.1} parent=0 // pred_check
    _
  $region27: #{compute_v_hat.1} parent=0 // pred_check_branch
    %26 = sbr.rel (0) target = $region29
  $region28: #{compute_v_hat.1} parent=0 // pred_region
    _
  $region29: #{compute_v_hat.1} parent=0 // pred_fallthru
    _
  %v28 = vld [vmem:[%s1] sm:$0xf]
  %v29 = vld [vmem:[%s1 + $0x4] sm:$0xf]
  %v30 = vld [vmem:[%s1 + $0x8] sm:$0xf]
  %v31 = vld [vmem:[%s1 + $0xc] sm:$0xf]
  %v32 = vld [vmem:[%s1 + $0x10] sm:$0xf]
  %v33 = vld [vmem:[%s1 + $0x14] sm:$0xf]
  %v34 = vld [vmem:[%s1 + $0x18] sm:$0xf]
  %v35 = vld [vmem:[%s1 + $0x1c] sm:$0xf]
  %v36 = vld [vmem:[%s1 + $0x20] sm:$0xf]
  %v37 = vld [vmem:[%s1 + $0x24] sm:$0xf]
  %v38 = vld [vmem:[%s1 + $0x28] sm:$0xf]
  %v39 = vld [vmem:[%s1 + $0x2c] sm:$0xf]
  %v40 = vld [vmem:[%s1 + $0x30] sm:$0xf]
  %v41 = vld [vmem:[%s1 + $0x34] sm:$0xf]
  %v42 = vld [vmem:[%s1 + $0x38] sm:$0xf]
  %v43 = vld [vmem:[%s1 + $0x3c] sm:$0xf]
  %v44 = vld [vmem:[%s1 + $0x40] sm:$0xf]
  %v45 = vld [vmem:[%s1 + $0x44] sm:$0xf]
  %v46 = vld [vmem:[%s1 + $0x48] sm:$0xf]
  %v47 = vld [vmem:[%s1 + $0x4c] sm:$0xf]
  %v48 = vld [vmem:[%s1 + $0x50] sm:$0xf]
  %v49 = vld [vmem:[%s1 + $0x54] sm:$0xf]
  %v50 = vld [vmem:[%s1 + $0x58] sm:$0xf]
  %v51 = vld [vmem:[%s1 + $0x5c] sm:$0xf]
  %v52 = vld [vmem:[%s1 + $0x60] sm:$0xf]
  %v53 = vld [vmem:[%s1 + $0x64] sm:$0xf]
  %v54 = vld [vmem:[%s1 + $0x68] sm:$0xf]
  %v55 = vld [vmem:[%s1 + $0x6c] sm:$0xf]
  %v56 = vld [vmem:[%s1 + $0x70] sm:$0xf]
  %v57 = vld [vmem:[%s1 + $0x74] sm:$0xf]
  %v58 = vld [vmem:[%s1 + $0x78] sm:$0xf]
  %v59 = vld [vmem:[%s1 + $0x7c] sm:$0xf]
  %v60 = vld [vmem:[%s1 + $0x80] sm:$0xf]
  %v61 = vld [vmem:[%s1 + $0x84] sm:$0xf]
  %v62 = vld [vmem:[%s1 + $0x88] sm:$0xf]
  %v63 = vld [vmem:[%s1 + $0x8c] sm:$0xf]
  %v64 = vld [vmem:[%s1 + $0x90] sm:$0xf]
  %v65 = vld [vmem:[%s1 + $0x94] sm:$0xf]
  %v66 = vld [vmem:[%s1 + $0x98] sm:$0xf]
  %v67 = vld [vmem:[%s1 + $0x9c] sm:$0xf]
  %v68 = vld [vmem:[%s1 + $0xa0] sm:$0xf]
  %v69 = vld [vmem:[%s1 + $0xa4] sm:$0xf]
  %v70 = vld [vmem:[%s1 + $0xa8] sm:$0xf]
  %v71 = vld [vmem:[%s1 + $0xac] sm:$0xf]
  %v72 = vld [vmem:[%s1 + $0xb0] sm:$0xf]
  %v73 = vld [vmem:[%s1 + $0xb4] sm:$0xf]
  %v74 = vld [vmem:[%s1 + $0xb8] sm:$0xf]
  %v75 = vld [vmem:[%s1 + $0xbc] sm:$0xf]
  %v76 = vld [vmem:[%s1 + $0xc0] sm:$0xf]
  %v77 = vld [vmem:[%s1 + $0xc4] sm:$0xf]
  %v78 = vld [vmem:[%s1 + $0xc8] sm:$0xf]
  %v79 = vld [vmem:[%s1 + $0xcc] sm:$0xf]
  %v80 = vld [vmem:[%s1 + $0xd0] sm:$0xf]
  %v81 = vld [vmem:[%s1 + $0xd4] sm:$0xf]
  %v82 = vld [vmem:[%s1 + $0xd8] sm:$0xf]
  %v83 = vld [vmem:[%s1 + $0xdc] sm:$0xf]
  %v84 = vld [vmem:[%s1 + $0xe0] sm:$0xf]
  %v85 = vld [vmem:[%s1 + $0xe4] sm:$0xf]
  %v86 = vld [vmem:[%s1 + $0xe8] sm:$0xf]
  %v87 = vld [vmem:[%s1 + $0xec] sm:$0xf]
  %v88 = vld [vmem:[%s1 + $0xf0] sm:$0xf]
  %v89 = vld [vmem:[%s1 + $0xf4] sm:$0xf]
  %v90 = vld [vmem:[%s1 + $0xf8] sm:$0xf]
  %v91 = vld [vmem:[%s1 + $0xfc] sm:$0xf]
  %v92 = vld [vmem:[%s0] sm:$0xf]
  %v93 = vld [vmem:[%s0 + $0x4] sm:$0xf]
  %v94 = vld [vmem:[%s0 + $0x8] sm:$0xf]
  %v95 = vld [vmem:[%s0 + $0xc] sm:$0xf]
  %v96 = vld [vmem:[%s2] sm:$0xff]
  %v97 = vld [vmem:[%s2 + $0x8] sm:$0xff]
  %v98 = vld [vmem:[%s2 + $0x10] sm:$0xff]
  %v99 = vld [vmem:[%s2 + $0x18] sm:$0xff]
  %v100 = vld [vmem:[%s2 + $0x20] sm:$0xff]
  %v101 = vld [vmem:[%s2 + $0x28] sm:$0xff]
  %v102 = vld [vmem:[%s2 + $0x30] sm:$0xff]
  %v103 = vld [vmem:[%s2 + $0x38] sm:$0xff]
  %v104 = vld [vmem:[%s2 + $0x40] sm:$0xff]
  %v105 = vld [vmem:[%s2 + $0x48] sm:$0xff]
  %v106 = vld [vmem:[%s2 + $0x50] sm:$0xff]
  %v107 = vld [vmem:[%s2 + $0x58] sm:$0xff]
  %v108 = vld [vmem:[%s2 + $0x60] sm:$0xff]
  %v109 = vld [vmem:[%s2 + $0x68] sm:$0xff]
  %v110 = vld [vmem:[%s2 + $0x70] sm:$0xff]
  %v111 = vld [vmem:[%s2 + $0x78] sm:$0xff]
  %v112 = vld [vmem:[%s2 + $0x80] sm:$0xff]
  %v113 = vld [vmem:[%s2 + $0x88] sm:$0xff]
  %v114 = vld [vmem:[%s2 + $0x90] sm:$0xff]
  %v115 = vld [vmem:[%s2 + $0x98] sm:$0xff]
  %v116 = vld [vmem:[%s2 + $0xa0] sm:$0xff]
  %v117 = vld [vmem:[%s2 + $0xa8] sm:$0xff]
  %v118 = vld [vmem:[%s2 + $0xb0] sm:$0xff]
  %v119 = vld [vmem:[%s2 + $0xb8] sm:$0xff]
  %v120 = vld [vmem:[%s2 + $0xc0] sm:$0xff]
  %v121 = vld [vmem:[%s2 + $0xc8] sm:$0xff]
  %v122 = vld [vmem:[%s2 + $0xd0] sm:$0xff]
  %v123 = vld [vmem:[%s2 + $0xd8] sm:$0xff]
  %v124 = vld [vmem:[%s2 + $0xe0] sm:$0xff]
  %v125 = vld [vmem:[%s2 + $0xe8] sm:$0xff]
  %v126 = vld [vmem:[%s2 + $0xf0] sm:$0xff]
  %v127 = vld [vmem:[%s2 + $0xf8] sm:$0xff]
  %v128 = vld [vmem:[%s2 + $0x100] sm:$0xff]
  %v129 = vld [vmem:[%s2 + $0x108] sm:$0xff]
  %v130 = vld [vmem:[%s2 + $0x110] sm:$0xff]
  %v131 = vld [vmem:[%s2 + $0x118] sm:$0xff]
  %v132 = vld [vmem:[%s2 + $0x120] sm:$0xff]
  %v133 = vld [vmem:[%s2 + $0x128] sm:$0xff]
  %v134 = vld [vmem:[%s2 + $0x130] sm:$0xff]
  %v135 = vld [vmem:[%s2 + $0x138] sm:$0xff]
  %v136 = vld [vmem:[%s2 + $0x140] sm:$0xff]
  %v137 = vld [vmem:[%s2 + $0x148] sm:$0xff]
  %v138 = vld [vmem:[%s2 + $0x150] sm:$0xff]
  %v139 = vld [vmem:[%s2 + $0x158] sm:$0xff]
  %v140 = vld [vmem:[%s2 + $0x160] sm:$0xff]
  %v141 = vld [vmem:[%s2 + $0x168] sm:$0xff]
  %v142 = vld [vmem:[%s2 + $0x170] sm:$0xff]
  %v143 = vld [vmem:[%s2 + $0x178] sm:$0xff]
  %v144 = vld [vmem:[%s2 + $0x180] sm:$0xff]
  %v145 = vld [vmem:[%s2 + $0x188] sm:$0xff]
  %v146 = vld [vmem:[%s2 + $0x190] sm:$0xff]
  %v147 = vld [vmem:[%s2 + $0x198] sm:$0xff]
  %v148 = vld [vmem:[%s2 + $0x1a0] sm:$0xff]
  %v149 = vld [vmem:[%s2 + $0x1a8] sm:$0xff]
  %v150 = vld [vmem:[%s2 + $0x1b0] sm:$0xff]
  %v151 = vld [vmem:[%s2 + $0x1b8] sm:$0xff]
  %v152 = vld [vmem:[%s2 + $0x1c0] sm:$0xff]
  %v153 = vld [vmem:[%s2 + $0x1c8] sm:$0xff]
  %v154 = vld [vmem:[%s2 + $0x1d0] sm:$0xff]
  %v155 = vld [vmem:[%s2 + $0x1d8] sm:$0xff]
  %v156 = vld [vmem:[%s2 + $0x1e0] sm:$0xff]
  %v157 = vld [vmem:[%s2 + $0x1e8] sm:$0xff]
  %v158 = vld [vmem:[%s2 + $0x1f0] sm:$0xff]
  %v159 = vld [vmem:[%s2 + $0x1f8] sm:$0xff]
  %161 = vset.pattern.permute.xlu0 0
  %162 = vperm.xlu0 %161, %v96
  %v163 = vpop.permute.xlu0 %162
  %166 = vset.pattern.permute.xlu0 0
  %167 = vperm.xlu0 %166, %v97
  %v168 = vpop.permute.xlu0 %167
  %171 = vset.pattern.permute.xlu0 0
  %172 = vperm.xlu0 %171, %v98
  %v173 = vpop.permute.xlu0 %172
  %176 = vset.pattern.permute.xlu0 0
  %177 = vperm.xlu0 %176, %v99
  %v178 = vpop.permute.xlu0 %177
  %181 = vset.pattern.permute.xlu0 0
  %182 = vperm.xlu0 %181, %v100
  %v183 = vpop.permute.xlu0 %182
  %186 = vset.pattern.permute.xlu0 0
  %187 = vperm.xlu0 %186, %v101
  %v188 = vpop.permute.xlu0 %187
  %191 = vset.pattern.permute.xlu0 0
  %192 = vperm.xlu0 %191, %v102
  %v193 = vpop.permute.xlu0 %192
  %196 = vset.pattern.permute.xlu0 0
  %197 = vperm.xlu0 %196, %v103
  %v198 = vpop.permute.xlu0 %197
  %201 = vset.pattern.permute.xlu0 0
  %202 = vperm.xlu0 %201, %v104
  %v203 = vpop.permute.xlu0 %202
  %206 = vset.pattern.permute.xlu0 0
  %207 = vperm.xlu0 %206, %v105
  %v208 = vpop.permute.xlu0 %207
  %211 = vset.pattern.permute.xlu0 0
  %212 = vperm.xlu0 %211, %v106
  %v213 = vpop.permute.xlu0 %212
  %216 = vset.pattern.permute.xlu0 0
  %217 = vperm.xlu0 %216, %v107
  %v218 = vpop.permute.xlu0 %217
  %221 = vset.pattern.permute.xlu0 0
  %222 = vperm.xlu0 %221, %v108
  %v223 = vpop.permute.xlu0 %222
  %226 = vset.pattern.permute.xlu0 0
  %227 = vperm.xlu0 %226, %v109
  %v228 = vpop.permute.xlu0 %227
  %231 = vset.pattern.permute.xlu0 0
  %232 = vperm.xlu0 %231, %v110
  %v233 = vpop.permute.xlu0 %232
  %236 = vset.pattern.permute.xlu0 0
  %237 = vperm.xlu0 %236, %v111
  %v238 = vpop.permute.xlu0 %237
  %241 = vset.pattern.permute.xlu0 0
  %242 = vperm.xlu0 %241, %v112
  %v243 = vpop.permute.xlu0 %242
  %246 = vset.pattern.permute.xlu0 0
  %247 = vperm.xlu0 %246, %v113
  %v248 = vpop.permute.xlu0 %247
  %251 = vset.pattern.permute.xlu0 0
  %252 = vperm.xlu0 %251, %v114
  %v253 = vpop.permute.xlu0 %252
  %256 = vset.pattern.permute.xlu0 0
  %257 = vperm.xlu0 %256, %v115
  %v258 = vpop.permute.xlu0 %257
  %261 = vset.pattern.permute.xlu0 0
  %262 = vperm.xlu0 %261, %v116
  %v263 = vpop.permute.xlu0 %262
  %266 = vset.pattern.permute.xlu0 0
  %267 = vperm.xlu0 %266, %v117
  %v268 = vpop.permute.xlu0 %267
  %271 = vset.pattern.permute.xlu0 0
  %272 = vperm.xlu0 %271, %v118
  %v273 = vpop.permute.xlu0 %272
  %276 = vset.pattern.permute.xlu0 0
  %277 = vperm.xlu0 %276, %v119
  %v278 = vpop.permute.xlu0 %277
  %281 = vset.pattern.permute.xlu0 0
  %282 = vperm.xlu0 %281, %v120
  %v283 = vpop.permute.xlu0 %282
  %286 = vset.pattern.permute.xlu0 0
  %287 = vperm.xlu0 %286, %v121
  %v288 = vpop.permute.xlu0 %287
  %291 = vset.pattern.permute.xlu0 0
  %292 = vperm.xlu0 %291, %v122
  %v293 = vpop.permute.xlu0 %292
  %296 = vset.pattern.permute.xlu0 0
  %297 = vperm.xlu0 %296, %v123
  %v298 = vpop.permute.xlu0 %297
  %301 = vset.pattern.permute.xlu0 0
  %302 = vperm.xlu0 %301, %v124
  %v303 = vpop.permute.xlu0 %302
  %306 = vset.pattern.permute.xlu0 0
  %307 = vperm.xlu0 %306, %v125
  %v308 = vpop.permute.xlu0 %307
  %311 = vset.pattern.permute.xlu0 0
  %312 = vperm.xlu0 %311, %v126
  %v313 = vpop.permute.xlu0 %312
  %316 = vset.pattern.permute.xlu0 0
  %317 = vperm.xlu0 %316, %v127
  %v318 = vpop.permute.xlu0 %317
  %321 = vset.pattern.permute.xlu0 0
  %322 = vperm.xlu0 %321, %v128
  %v323 = vpop.permute.xlu0 %322
  %326 = vset.pattern.permute.xlu0 0
  %327 = vperm.xlu0 %326, %v129
  %v328 = vpop.permute.xlu0 %327
  %331 = vset.pattern.permute.xlu0 0
  %332 = vperm.xlu0 %331, %v130
  %v333 = vpop.permute.xlu0 %332
  %336 = vset.pattern.permute.xlu0 0
  %337 = vperm.xlu0 %336, %v131
  %v338 = vpop.permute.xlu0 %337
  %341 = vset.pattern.permute.xlu0 0
  %342 = vperm.xlu0 %341, %v132
  %v343 = vpop.permute.xlu0 %342
  %346 = vset.pattern.permute.xlu0 0
  %347 = vperm.xlu0 %346, %v133
  %v348 = vpop.permute.xlu0 %347
  %351 = vset.pattern.permute.xlu0 0
  %352 = vperm.xlu0 %351, %v134
  %v353 = vpop.permute.xlu0 %352
  %356 = vset.pattern.permute.xlu0 0
  %357 = vperm.xlu0 %356, %v135
  %v358 = vpop.permute.xlu0 %357
  %361 = vset.pattern.permute.xlu0 0
  %362 = vperm.xlu0 %361, %v136
  %v363 = vpop.permute.xlu0 %362
  %366 = vset.pattern.permute.xlu0 0
  %367 = vperm.xlu0 %366, %v137
  %v368 = vpop.permute.xlu0 %367
  %371 = vset.pattern.permute.xlu0 0
  %372 = vperm.xlu0 %371, %v138
  %v373 = vpop.permute.xlu0 %372
  %376 = vset.pattern.permute.xlu0 0
  %377 = vperm.xlu0 %376, %v139
  %v378 = vpop.permute.xlu0 %377
  %381 = vset.pattern.permute.xlu0 0
  %382 = vperm.xlu0 %381, %v140
  %v383 = vpop.permute.xlu0 %382
  %386 = vset.pattern.permute.xlu0 0
  %387 = vperm.xlu0 %386, %v141
  %v388 = vpop.permute.xlu0 %387
  %391 = vset.pattern.permute.xlu0 0
  %392 = vperm.xlu0 %391, %v142
  %v393 = vpop.permute.xlu0 %392
  %396 = vset.pattern.permute.xlu0 0
  %397 = vperm.xlu0 %396, %v143
  %v398 = vpop.permute.xlu0 %397
  %401 = vset.pattern.permute.xlu0 0
  %402 = vperm.xlu0 %401, %v144
  %v403 = vpop.permute.xlu0 %402
  %406 = vset.pattern.permute.xlu0 0
  %407 = vperm.xlu0 %406, %v145
  %v408 = vpop.permute.xlu0 %407
  %411 = vset.pattern.permute.xlu0 0
  %412 = vperm.xlu0 %411, %v146
  %v413 = vpop.permute.xlu0 %412
  %416 = vset.pattern.permute.xlu0 0
  %417 = vperm.xlu0 %416, %v147
  %v418 = vpop.permute.xlu0 %417
  %421 = vset.pattern.permute.xlu0 0
  %422 = vperm.xlu0 %421, %v148
  %v423 = vpop.permute.xlu0 %422
  %426 = vset.pattern.permute.xlu0 0
  %427 = vperm.xlu0 %426, %v149
  %v428 = vpop.permute.xlu0 %427
  %431 = vset.pattern.permute.xlu0 0
  %432 = vperm.xlu0 %431, %v150
  %v433 = vpop.permute.xlu0 %432
  %436 = vset.pattern.permute.xlu0 0
  %437 = vperm.xlu0 %436, %v151
  %v438 = vpop.permute.xlu0 %437
  %441 = vset.pattern.permute.xlu0 0
  %442 = vperm.xlu0 %441, %v152
  %v443 = vpop.permute.xlu0 %442
  %446 = vset.pattern.permute.xlu0 0
  %447 = vperm.xlu0 %446, %v153
  %v448 = vpop.permute.xlu0 %447
  %451 = vset.pattern.permute.xlu0 0
  %452 = vperm.xlu0 %451, %v154
  %v453 = vpop.permute.xlu0 %452
  %456 = vset.pattern.permute.xlu0 0
  %457 = vperm.xlu0 %456, %v155
  %v458 = vpop.permute.xlu0 %457
  %461 = vset.pattern.permute.xlu0 0
  %462 = vperm.xlu0 %461, %v156
  %v463 = vpop.permute.xlu0 %462
  %466 = vset.pattern.permute.xlu0 0
  %467 = vperm.xlu0 %466, %v157
  %v468 = vpop.permute.xlu0 %467
  %471 = vset.pattern.permute.xlu0 0
  %472 = vperm.xlu0 %471, %v158
  %v473 = vpop.permute.xlu0 %472
  %476 = vset.pattern.permute.xlu0 0
  %477 = vperm.xlu0 %476, %v159
  %v478 = vpop.permute.xlu0 %477
  %v544 = vunpack.c.l.b16 %v28
  %v545 = vunpack.c.l.b16 %v29
  %v546 = vunpack.c.l.b16 %v30
  %v547 = vunpack.c.l.b16 %v31
  %v548 = vunpack.c.l.b16 %v32
  %v549 = vunpack.c.l.b16 %v33
  %v550 = vunpack.c.l.b16 %v34
  %v551 = vunpack.c.l.b16 %v35
  %v552 = vunpack.c.l.b16 %v36
  %v553 = vunpack.c.l.b16 %v37
  %v554 = vunpack.c.l.b16 %v38
  %v555 = vunpack.c.l.b16 %v39
  %v556 = vunpack.c.l.b16 %v40
  %v557 = vunpack.c.l.b16 %v41
  %v558 = vunpack.c.l.b16 %v42
  %v559 = vunpack.c.l.b16 %v43
  %v560 = vunpack.c.l.b16 %v44
  %v561 = vunpack.c.l.b16 %v45
  %v562 = vunpack.c.l.b16 %v46
  %v563 = vunpack.c.l.b16 %v47
  %v564 = vunpack.c.l.b16 %v48
  %v565 = vunpack.c.l.b16 %v49
  %v566 = vunpack.c.l.b16 %v50
  %v567 = vunpack.c.l.b16 %v51
  %v568 = vunpack.c.l.b16 %v52
  %v569 = vunpack.c.l.b16 %v53
  %v570 = vunpack.c.l.b16 %v54
  %v571 = vunpack.c.l.b16 %v55
  %v572 = vunpack.c.l.b16 %v56
  %v573 = vunpack.c.l.b16 %v57
  %v574 = vunpack.c.l.b16 %v58
  %v575 = vunpack.c.l.b16 %v59
  %v576 = vunpack.c.l.b16 %v60
  %v577 = vunpack.c.l.b16 %v61
  %v578 = vunpack.c.l.b16 %v62
  %v579 = vunpack.c.l.b16 %v63
  %v580 = vunpack.c.l.b16 %v64
  %v581 = vunpack.c.l.b16 %v65
  %v582 = vunpack.c.l.b16 %v66
  %v583 = vunpack.c.l.b16 %v67
  %v584 = vunpack.c.l.b16 %v68
  %v585 = vunpack.c.l.b16 %v69
  %v586 = vunpack.c.l.b16 %v70
  %v587 = vunpack.c.l.b16 %v71
  %v588 = vunpack.c.l.b16 %v72
  %v589 = vunpack.c.l.b16 %v73
  %v590 = vunpack.c.l.b16 %v74
  %v591 = vunpack.c.l.b16 %v75
  %v592 = vunpack.c.l.b16 %v76
  %v593 = vunpack.c.l.b16 %v77
  %v594 = vunpack.c.l.b16 %v78
  %v595 = vunpack.c.l.b16 %v79
  %v596 = vunpack.c.l.b16 %v80
  %v597 = vunpack.c.l.b16 %v81
  %v598 = vunpack.c.l.b16 %v82
  %v599 = vunpack.c.l.b16 %v83
  %v600 = vunpack.c.l.b16 %v84
  %v601 = vunpack.c.l.b16 %v85
  %v602 = vunpack.c.l.b16 %v86
  %v603 = vunpack.c.l.b16 %v87
  %v604 = vunpack.c.l.b16 %v88
  %v605 = vunpack.c.l.b16 %v89
  %v606 = vunpack.c.l.b16 %v90
  %v607 = vunpack.c.l.b16 %v91
  %v608 = vpack.c.b16 %v545, %v544
  %v609 = vpack.c.b16 %v547, %v546
  %v610 = vpack.c.b16 %v549, %v548
  %v611 = vpack.c.b16 %v551, %v550
  %v612 = vpack.c.b16 %v553, %v552
  %v613 = vpack.c.b16 %v555, %v554
  %v614 = vpack.c.b16 %v557, %v556
  %v615 = vpack.c.b16 %v559, %v558
  %v616 = vpack.c.b16 %v561, %v560
  %v617 = vpack.c.b16 %v563, %v562
  %v618 = vpack.c.b16 %v565, %v564
  %v619 = vpack.c.b16 %v567, %v566
  %v620 = vpack.c.b16 %v569, %v568
  %v621 = vpack.c.b16 %v571, %v570
  %v622 = vpack.c.b16 %v573, %v572
  %v623 = vpack.c.b16 %v575, %v574
  %v624 = vpack.c.b16 %v577, %v576
  %v625 = vpack.c.b16 %v579, %v578
  %v626 = vpack.c.b16 %v581, %v580
  %v627 = vpack.c.b16 %v583, %v582
  %v628 = vpack.c.b16 %v585, %v584
  %v629 = vpack.c.b16 %v587, %v586
  %v630 = vpack.c.b16 %v589, %v588
  %v631 = vpack.c.b16 %v591, %v590
  %v632 = vpack.c.b16 %v593, %v592
  %v633 = vpack.c.b16 %v595, %v594
  %v634 = vpack.c.b16 %v597, %v596
  %v635 = vpack.c.b16 %v599, %v598
  %v636 = vpack.c.b16 %v601, %v600
  %v637 = vpack.c.b16 %v603, %v602
  %v638 = vpack.c.b16 %v605, %v604
  %v639 = vpack.c.b16 %v607, %v606
  %v644 = vunpack.c.l.b16 %v92
  %v645 = vunpack.c.l.b16 %v93
  %v646 = vunpack.c.l.b16 %v94
  %v647 = vunpack.c.l.b16 %v95
  %v648 = vpack.c.b16 %v645, %v644
  %v649 = vpack.c.b16 %v647, %v646
  %vm652 = vcmask 261120
  %v654 = vsel %vm652, %v608, 0
  %v657 = vsel %vm652, %v609, 0
  %v660 = vsel %vm652, %v610, 0
  %v663 = vsel %vm652, %v611, 0
  %v666 = vsel %vm652, %v612, 0
  %v669 = vsel %vm652, %v613, 0
  %v672 = vsel %vm652, %v614, 0
  %v675 = vsel %vm652, %v615, 0
  %v678 = vsel %vm652, %v616, 0
  %v681 = vsel %vm652, %v617, 0
  %v684 = vsel %vm652, %v618, 0
  %v687 = vsel %vm652, %v619, 0
  %v690 = vsel %vm652, %v620, 0
  %v693 = vsel %vm652, %v621, 0
  %v696 = vsel %vm652, %v622, 0
  %v699 = vsel %vm652, %v623, 0
  %v702 = vsel %vm652, %v624, 0
  %v705 = vsel %vm652, %v625, 0
  %v708 = vsel %vm652, %v626, 0
  %v711 = vsel %vm652, %v627, 0
  %v714 = vsel %vm652, %v628, 0
  %v717 = vsel %vm652, %v629, 0
  %v720 = vsel %vm652, %v630, 0
  %v723 = vsel %vm652, %v631, 0
  %v726 = vsel %vm652, %v632, 0
  %v729 = vsel %vm652, %v633, 0
  %v732 = vsel %vm652, %v634, 0
  %v735 = vsel %vm652, %v635, 0
  %v738 = vsel %vm652, %v636, 0
  %v741 = vsel %vm652, %v637, 0
  %v744 = vsel %vm652, %v638, 0
  %v747 = vsel %vm652, %v639, 0
  %749 = vmatprep.subr.bf16.mxu0 0
  %750 = vmatpush1.bf16.msra.mxu0 %v648
  %751 = vmatprep.subr.bf16.mxu0 0
  %752 = vmatpush1.bf16.msra.mxu0 %v649
  %753 = vmatprep.subr.bf16.mxu0 0
  %754 = vmatpush1.bf16.msra.mxu0 0
  %755 = vmatprep.subr.bf16.mxu0 0
  %756 = vmatpush1.bf16.msra.mxu0 0
  %757 = vmatprep.subr.bf16.mxu0 0
  %758 = vmatpush1.bf16.msra.mxu0 0
  %759 = vmatprep.subr.bf16.mxu0 0
  %760 = vmatpush1.bf16.msra.mxu0 0
  %761 = vmatprep.subr.bf16.mxu0 0
  %762 = vmatpush1.bf16.msra.mxu0 0
  %763 = vmatprep.subr.bf16.mxu0 0
  %764 = vmatpush1.bf16.msra.mxu0 0
  %765 = vmatprep.subr.bf16.mxu0 0
  %766 = vmatpush1.bf16.msra.mxu0 0
  %767 = vmatprep.subr.bf16.mxu0 0
  %768 = vmatpush1.bf16.msra.mxu0 0
  %769 = vmatprep.subr.bf16.mxu0 0
  %770 = vmatpush1.bf16.msra.mxu0 0
  %771 = vmatprep.subr.bf16.mxu0 0
  %772 = vmatpush1.bf16.msra.mxu0 0
  %773 = vmatprep.subr.bf16.mxu0 0
  %774 = vmatpush1.bf16.msra.mxu0 0
  %775 = vmatprep.subr.bf16.mxu0 0
  %776 = vmatpush1.bf16.msra.mxu0 0
  %777 = vmatprep.subr.bf16.mxu0 0
  %778 = vmatpush1.bf16.msra.mxu0 0
  %779 = vmatprep.subr.bf16.mxu0 0
  %780 = vmatpush1.bf16.msra.mxu0 0
  %781 = vmatprep.mubr.bf16.mxu0 0
  %782 = vmatmul.mubr.bf16.gmra.mrb[0].mxu0 %v654
  %v783 = vpop.f32.mrb[0].mxu0
  %v784 = vadd.f32 %v163, %v783
  %v785 = vpop.f32.mrb[0].mxu0
  %v786 = vpop.f32.mrb[0].mxu0
  %v787 = vadd.f32 %v168, %v786
  %v788 = vpop.f32.mrb[0].mxu0
  %789 = vmatprep.mubr.bf16.mxu0 0
  %790 = vmatmul.mubr.bf16.gmra.mrb[0].mxu0 %v657
  %v791 = vpop.f32.mrb[0].mxu0
  %v792 = vadd.f32 %v173, %v791
  %v793 = vpop.f32.mrb[0].mxu0
  %v794 = vpop.f32.mrb[0].mxu0
  %v795 = vadd.f32 %v178, %v794
  %v796 = vpop.f32.mrb[0].mxu0
  %797 = vmatprep.mubr.bf16.mxu0 0
  %798 = vmatmul.mubr.bf16.gmra.mrb[0].mxu0 %v660
  %v799 = vpop.f32.mrb[0].mxu0
  %v800 = vadd.f32 %v183, %v799
  %v801 = vpop.f32.mrb[0].mxu0
  %v802 = vpop.f32.mrb[0].mxu0
  %v803 = vadd.f32 %v188, %v802
  %v804 = vpop.f32.mrb[0].mxu0
  %805 = vmatprep.mubr.bf16.mxu0 0
  %806 = vmatmul.mubr.bf16.gmra.mrb[0].mxu0 %v663
  %v807 = vpop.f32.mrb[0].mxu0
  %v808 = vadd.f32 %v193, %v807
  %v809 = vpop.f32.mrb[0].mxu0
  %v810 = vpop.f32.mrb[0].mxu0
  %v811 = vadd.f32 %v198, %v810
  %v812 = vpop.f32.mrb[0].mxu0
  %813 = vmatprep.mubr.bf16.mxu0 0
  %814 = vmatmul.mubr.bf16.gmra.mrb[0].mxu0 %v666
  %v815 = vpop.f32.mrb[0].mxu0
  %v816 = vadd.f32 %v203, %v815
  %v817 = vpop.f32.mrb[0].mxu0
  %v818 = vpop.f32.mrb[0].mxu0
  %v819 = vadd.f32 %v208, %v818
  %v820 = vpop.f32.mrb[0].mxu0
  %821 = vmatprep.mubr.bf16.mxu0 0
  %822 = vmatmul.mubr.bf16.gmra.mrb[0].mxu0 %v669
  %v823 = vpop.f32.mrb[0].mxu0
  %v824 = vadd.f32 %v213, %v823
  %v825 = vpop.f32.mrb[0].mxu0
  %v826 = vpop.f32.mrb[0].mxu0
  %v827 = vadd.f32 %v218, %v826
  %v828 = vpop.f32.mrb[0].mxu0
  %829 = vmatprep.mubr.bf16.mxu0 0
  %830 = vmatmul.mubr.bf16.gmra.mrb[0].mxu0 %v672
  %v831 = vpop.f32.mrb[0].mxu0
  %v832 = vadd.f32 %v223, %v831
  %v833 = vpop.f32.mrb[0].mxu0
  %v834 = vpop.f32.mrb[0].mxu0
  %v835 = vadd.f32 %v228, %v834
  %v836 = vpop.f32.mrb[0].mxu0
  %837 = vmatprep.mubr.bf16.mxu0 0
  %838 = vmatmul.mubr.bf16.gmra.mrb[0].mxu0 %v675
  %v839 = vpop.f32.mrb[0].mxu0
  %v840 = vadd.f32 %v233, %v839
  %v841 = vpop.f32.mrb[0].mxu0
  %v842 = vpop.f32.mrb[0].mxu0
  %v843 = vadd.f32 %v238, %v842
  %v844 = vpop.f32.mrb[0].mxu0
  %845 = vmatprep.mubr.bf16.mxu0 0
  %846 = vmatmul.mubr.bf16.gmra.mrb[0].mxu0 %v678
  %v847 = vpop.f32.mrb[0].mxu0
  %v848 = vadd.f32 %v243, %v847
  %v849 = vpop.f32.mrb[0].mxu0
  %v850 = vpop.f32.mrb[0].mxu0
  %v851 = vadd.f32 %v248, %v850
  %v852 = vpop.f32.mrb[0].mxu0
  %853 = vmatprep.mubr.bf16.mxu0 0
  %854 = vmatmul.mubr.bf16.gmra.mrb[0].mxu0 %v681
  %v855 = vpop.f32.mrb[0].mxu0
  %v856 = vadd.f32 %v253, %v855
  %v857 = vpop.f32.mrb[0].mxu0
  %v858 = vpop.f32.mrb[0].mxu0
  %v859 = vadd.f32 %v258, %v858
  %v860 = vpop.f32.mrb[0].mxu0
  %861 = vmatprep.mubr.bf16.mxu0 0
  %862 = vmatmul.mubr.bf16.gmra.mrb[0].mxu0 %v684
  %v863 = vpop.f32.mrb[0].mxu0
  %v864 = vadd.f32 %v263, %v863
  %v865 = vpop.f32.mrb[0].mxu0
  %v866 = vpop.f32.mrb[0].mxu0
  %v867 = vadd.f32 %v268, %v866
  %v868 = vpop.f32.mrb[0].mxu0
  %869 = vmatprep.mubr.bf16.mxu0 0
  %870 = vmatmul.mubr.bf16.gmra.mrb[0].mxu0 %v687
  %v871 = vpop.f32.mrb[0].mxu0
  %v872 = vadd.f32 %v273, %v871
  %v873 = vpop.f32.mrb[0].mxu0
  %v874 = vpop.f32.mrb[0].mxu0
  %v875 = vadd.f32 %v278, %v874
  %v876 = vpop.f32.mrb[0].mxu0
  %877 = vmatprep.mubr.bf16.mxu0 0
  %878 = vmatmul.mubr.bf16.gmra.mrb[0].mxu0 %v690
  %v879 = vpop.f32.mrb[0].mxu0
  %v880 = vadd.f32 %v283, %v879
  %v881 = vpop.f32.mrb[0].mxu0
  %v882 = vpop.f32.mrb[0].mxu0
  %v883 = vadd.f32 %v288, %v882
  %v884 = vpop.f32.mrb[0].mxu0
  %885 = vmatprep.mubr.bf16.mxu0 0
  %886 = vmatmul.mubr.bf16.gmra.mrb[0].mxu0 %v693
  %v887 = vpop.f32.mrb[0].mxu0
  %v888 = vadd.f32 %v293, %v887
  %v889 = vpop.f32.mrb[0].mxu0
  %v890 = vpop.f32.mrb[0].mxu0
  %v891 = vadd.f32 %v298, %v890
  %v892 = vpop.f32.mrb[0].mxu0
  %893 = vmatprep.mubr.bf16.mxu0 0
  %894 = vmatmul.mubr.bf16.gmra.mrb[0].mxu0 %v696
  %v895 = vpop.f32.mrb[0].mxu0
  %v896 = vadd.f32 %v303, %v895
  %v897 = vpop.f32.mrb[0].mxu0
  %v898 = vpop.f32.mrb[0].mxu0
  %v899 = vadd.f32 %v308, %v898
  %v900 = vpop.f32.mrb[0].mxu0
  %901 = vmatprep.mubr.bf16.mxu0 0
  %902 = vmatmul.mubr.bf16.gmra.mrb[0].mxu0 %v699
  %v903 = vpop.f32.mrb[0].mxu0
  %v904 = vadd.f32 %v313, %v903
  %v905 = vpop.f32.mrb[0].mxu0
  %v906 = vpop.f32.mrb[0].mxu0
  %v907 = vadd.f32 %v318, %v906
  %v908 = vpop.f32.mrb[0].mxu0
  %909 = vmatprep.mubr.bf16.mxu0 0
  %910 = vmatmul.mubr.bf16.gmra.mrb[0].mxu0 %v702
  %v911 = vpop.f32.mrb[0].mxu0
  %v912 = vadd.f32 %v323, %v911
  %v913 = vpop.f32.mrb[0].mxu0
  %v914 = vpop.f32.mrb[0].mxu0
  %v915 = vadd.f32 %v328, %v914
  %v916 = vpop.f32.mrb[0].mxu0
  %917 = vmatprep.mubr.bf16.mxu0 0
  %918 = vmatmul.mubr.bf16.gmra.mrb[0].mxu0 %v705
  %v919 = vpop.f32.mrb[0].mxu0
  %v920 = vadd.f32 %v333, %v919
  %v921 = vpop.f32.mrb[0].mxu0
  %v922 = vpop.f32.mrb[0].mxu0
  %v923 = vadd.f32 %v338, %v922
  %v924 = vpop.f32.mrb[0].mxu0
  %925 = vmatprep.mubr.bf16.mxu0 0
  %926 = vmatmul.mubr.bf16.gmra.mrb[0].mxu0 %v708
  %v927 = vpop.f32.mrb[0].mxu0
  %v928 = vadd.f32 %v343, %v927
  %v929 = vpop.f32.mrb[0].mxu0
  %v930 = vpop.f32.mrb[0].mxu0
  %v931 = vadd.f32 %v348, %v930
  %v932 = vpop.f32.mrb[0].mxu0
  %933 = vmatprep.mubr.bf16.mxu0 0
  %934 = vmatmul.mubr.bf16.gmra.mrb[0].mxu0 %v711
  %v935 = vpop.f32.mrb[0].mxu0
  %v936 = vadd.f32 %v353, %v935
  %v937 = vpop.f32.mrb[0].mxu0
  %v938 = vpop.f32.mrb[0].mxu0
  %v939 = vadd.f32 %v358, %v938
  %v940 = vpop.f32.mrb[0].mxu0
  %941 = vmatprep.mubr.bf16.mxu0 0
  %942 = vmatmul.mubr.bf16.gmra.mrb[0].mxu0 %v714
  %v943 = vpop.f32.mrb[0].mxu0
  %v944 = vadd.f32 %v363, %v943
  %v945 = vpop.f32.mrb[0].mxu0
  %v946 = vpop.f32.mrb[0].mxu0
  %v947 = vadd.f32 %v368, %v946
  %v948 = vpop.f32.mrb[0].mxu0
  %949 = vmatprep.mubr.bf16.mxu0 0
  %950 = vmatmul.mubr.bf16.gmra.mrb[0].mxu0 %v717
  %v951 = vpop.f32.mrb[0].mxu0
  %v952 = vadd.f32 %v373, %v951
  %v953 = vpop.f32.mrb[0].mxu0
  %v954 = vpop.f32.mrb[0].mxu0
  %v955 = vadd.f32 %v378, %v954
  %v956 = vpop.f32.mrb[0].mxu0
  %957 = vmatprep.mubr.bf16.mxu0 0
  %958 = vmatmul.mubr.bf16.gmra.mrb[0].mxu0 %v720
  %v959 = vpop.f32.mrb[0].mxu0
  %v960 = vadd.f32 %v383, %v959
  %v961 = vpop.f32.mrb[0].mxu0
  %v962 = vpop.f32.mrb[0].mxu0
  %v963 = vadd.f32 %v388, %v962
  %v964 = vpop.f32.mrb[0].mxu0
  %965 = vmatprep.mubr.bf16.mxu0 0
  %966 = vmatmul.mubr.bf16.gmra.mrb[0].mxu0 %v723
  %v967 = vpop.f32.mrb[0].mxu0
  %v968 = vadd.f32 %v393, %v967
  %v969 = vpop.f32.mrb[0].mxu0
  %v970 = vpop.f32.mrb[0].mxu0
  %v971 = vadd.f32 %v398, %v970
  %v972 = vpop.f32.mrb[0].mxu0
  %973 = vmatprep.mubr.bf16.mxu0 0
  %974 = vmatmul.mubr.bf16.gmra.mrb[0].mxu0 %v726
  %v975 = vpop.f32.mrb[0].mxu0
  %v976 = vadd.f32 %v403, %v975
  %v977 = vpop.f32.mrb[0].mxu0
  %v978 = vpop.f32.mrb[0].mxu0
  %v979 = vadd.f32 %v408, %v978
  %v980 = vpop.f32.mrb[0].mxu0
  %981 = vmatprep.mubr.bf16.mxu0 0
  %982 = vmatmul.mubr.bf16.gmra.mrb[0].mxu0 %v729
  %v983 = vpop.f32.mrb[0].mxu0
  %v984 = vadd.f32 %v413, %v983
  %v985 = vpop.f32.mrb[0].mxu0
  %v986 = vpop.f32.mrb[0].mxu0
  %v987 = vadd.f32 %v418, %v986
  %v988 = vpop.f32.mrb[0].mxu0
  %989 = vmatprep.mubr.bf16.mxu0 0
  %990 = vmatmul.mubr.bf16.gmra.mrb[0].mxu0 %v732
  %v991 = vpop.f32.mrb[0].mxu0
  %v992 = vadd.f32 %v423, %v991
  %v993 = vpop.f32.mrb[0].mxu0
  %v994 = vpop.f32.mrb[0].mxu0
  %v995 = vadd.f32 %v428, %v994
  %v996 = vpop.f32.mrb[0].mxu0
  %997 = vmatprep.mubr.bf16.mxu0 0
  %998 = vmatmul.mubr.bf16.gmra.mrb[0].mxu0 %v735
  %v999 = vpop.f32.mrb[0].mxu0
  %v1000 = vadd.f32 %v433, %v999
  %v1001 = vpop.f32.mrb[0].mxu0
  %v1002 = vpop.f32.mrb[0].mxu0
  %v1003 = vadd.f32 %v438, %v1002
  %v1004 = vpop.f32.mrb[0].mxu0
  %1005 = vmatprep.mubr.bf16.mxu0 0
  %1006 = vmatmul.mubr.bf16.gmra.mrb[0].mxu0 %v738
  %v1007 = vpop.f32.mrb[0].mxu0
  %v1008 = vadd.f32 %v443, %v1007
  %v1009 = vpop.f32.mrb[0].mxu0
  %v1010 = vpop.f32.mrb[0].mxu0
  %v1011 = vadd.f32 %v448, %v1010
  %v1012 = vpop.f32.mrb[0].mxu0
  %1013 = vmatprep.mubr.bf16.mxu0 0
  %1014 = vmatmul.mubr.bf16.gmra.mrb[0].mxu0 %v741
  %v1015 = vpop.f32.mrb[0].mxu0
  %v1016 = vadd.f32 %v453, %v1015
  %v1017 = vpop.f32.mrb[0].mxu0
  %v1018 = vpop.f32.mrb[0].mxu0
  %v1019 = vadd.f32 %v458, %v1018
  %v1020 = vpop.f32.mrb[0].mxu0
  %1021 = vmatprep.mubr.bf16.mxu0 0
  %1022 = vmatmul.mubr.bf16.gmra.mrb[0].mxu0 %v744
  %v1023 = vpop.f32.mrb[0].mxu0
  %v1024 = vadd.f32 %v463, %v1023
  %v1025 = vpop.f32.mrb[0].mxu0
  %v1026 = vpop.f32.mrb[0].mxu0
  %v1027 = vadd.f32 %v468, %v1026
  %v1028 = vpop.f32.mrb[0].mxu0
  %1029 = vmatprep.mubr.bf16.mxu0 0
  %1030 = vmatmul.mubr.bf16.gmra.mrb[0].mxu0 %v747
  %v1031 = vpop.f32.mrb[0].mxu0
  %v1032 = vadd.f32 %v473, %v1031
  %v1033 = vpop.f32.mrb[0].mxu0
  %v1034 = vpop.f32.mrb[0].mxu0
  %v1035 = vadd.f32 %v478, %v1034
  %v1036 = vpop.f32.mrb[0].mxu0
  %1037 = vdwg.mxu0
  %v1038 = vmax.f32 %v784, 0.0
  %v1039 = vmax.f32 %v787, 0.0
  %v1040 = vmax.f32 %v792, 0.0
  %v1041 = vmax.f32 %v795, 0.0
  %v1042 = vmax.f32 %v800, 0.0
  %v1043 = vmax.f32 %v803, 0.0
  %v1044 = vmax.f32 %v808, 0.0
  %v1045 = vmax.f32 %v811, 0.0
  %v1046 = vmax.f32 %v816, 0.0
  %v1047 = vmax.f32 %v819, 0.0
  %v1048 = vmax.f32 %v824, 0.0
  %v1049 = vmax.f32 %v827, 0.0
  %v1050 = vmax.f32 %v832, 0.0
  %v1051 = vmax.f32 %v835, 0.0
  %v1052 = vmax.f32 %v840, 0.0
  %v1053 = vmax.f32 %v843, 0.0
  %v1054 = vmax.f32 %v848, 0.0
  %v1055 = vmax.f32 %v851, 0.0
  %v1056 = vmax.f32 %v856, 0.0
  %v1057 = vmax.f32 %v859, 0.0
  %v1058 = vmax.f32 %v864, 0.0
  %v1059 = vmax.f32 %v867, 0.0
  %v1060 = vmax.f32 %v872, 0.0
  %v1061 = vmax.f32 %v875, 0.0
  %v1062 = vmax.f32 %v880, 0.0
  %v1063 = vmax.f32 %v883, 0.0
  %v1064 = vmax.f32 %v888, 0.0
  %v1065 = vmax.f32 %v891, 0.0
  %v1066 = vmax.f32 %v896, 0.0
  %v1067 = vmax.f32 %v899, 0.0
  %v1068 = vmax.f32 %v904, 0.0
  %v1069 = vmax.f32 %v907, 0.0
  %v1070 = vmax.f32 %v912, 0.0
  %v1071 = vmax.f32 %v915, 0.0
  %v1072 = vmax.f32 %v920, 0.0
  %v1073 = vmax.f32 %v923, 0.0
  %v1074 = vmax.f32 %v928, 0.0
  %v1075 = vmax.f32 %v931, 0.0
  %v1076 = vmax.f32 %v936, 0.0
  %v1077 = vmax.f32 %v939, 0.0
  %v1078 = vmax.f32 %v944, 0.0
  %v1079 = vmax.f32 %v947, 0.0
  %v1080 = vmax.f32 %v952, 0.0
  %v1081 = vmax.f32 %v955, 0.0
  %v1082 = vmax.f32 %v960, 0.0
  %v1083 = vmax.f32 %v963, 0.0
  %v1084 = vmax.f32 %v968, 0.0
  %v1085 = vmax.f32 %v971, 0.0
  %v1086 = vmax.f32 %v976, 0.0
  %v1087 = vmax.f32 %v979, 0.0
  %v1088 = vmax.f32 %v984, 0.0
  %v1089 = vmax.f32 %v987, 0.0
  %v1090 = vmax.f32 %v992, 0.0
  %v1091 = vmax.f32 %v995, 0.0
  %v1092 = vmax.f32 %v1000, 0.0
  %v1093 = vmax.f32 %v1003, 0.0
  %v1094 = vmax.f32 %v1008, 0.0
  %v1095 = vmax.f32 %v1011, 0.0
  %v1096 = vmax.f32 %v1016, 0.0
  %v1097 = vmax.f32 %v1019, 0.0
  %v1098 = vmax.f32 %v1024, 0.0
  %v1099 = vmax.f32 %v1027, 0.0
  %v1100 = vmax.f32 %v1032, 0.0
  %v1101 = vmax.f32 %v1035, 0.0
  %v1102 = vld [vmem:[%s3] sm:$0xff]
  %v1103 = vld [vmem:[%s3 + $0x8] sm:$0xff]
  %v1104 = vld [vmem:[%s3 + $0x10] sm:$0xff]
  %v1105 = vld [vmem:[%s3 + $0x18] sm:$0xff]
  %v1106 = vld [vmem:[%s3 + $0x20] sm:$0xff]
  %v1107 = vld [vmem:[%s3 + $0x28] sm:$0xff]
  %v1108 = vld [vmem:[%s3 + $0x30] sm:$0xff]
  %v1109 = vld [vmem:[%s3 + $0x38] sm:$0xff]
  %v1110 = vld [vmem:[%s3 + $0x40] sm:$0xff]
  %v1111 = vld [vmem:[%s3 + $0x48] sm:$0xff]
  %v1112 = vld [vmem:[%s3 + $0x50] sm:$0xff]
  %v1113 = vld [vmem:[%s3 + $0x58] sm:$0xff]
  %v1114 = vld [vmem:[%s3 + $0x60] sm:$0xff]
  %v1115 = vld [vmem:[%s3 + $0x68] sm:$0xff]
  %v1116 = vld [vmem:[%s3 + $0x70] sm:$0xff]
  %v1117 = vld [vmem:[%s3 + $0x78] sm:$0xff]
  %v1118 = vld [vmem:[%s3 + $0x80] sm:$0xff]
  %v1119 = vld [vmem:[%s3 + $0x88] sm:$0xff]
  %v1120 = vld [vmem:[%s3 + $0x90] sm:$0xff]
  %v1121 = vld [vmem:[%s3 + $0x98] sm:$0xff]
  %v1122 = vld [vmem:[%s3 + $0xa0] sm:$0xff]
  %v1123 = vld [vmem:[%s3 + $0xa8] sm:$0xff]
  %v1124 = vld [vmem:[%s3 + $0xb0] sm:$0xff]
  %v1125 = vld [vmem:[%s3 + $0xb8] sm:$0xff]
  %v1126 = vld [vmem:[%s3 + $0xc0] sm:$0xff]
  %v1127 = vld [vmem:[%s3 + $0xc8] sm:$0xff]
  %v1128 = vld [vmem:[%s3 + $0xd0] sm:$0xff]
  %v1129 = vld [vmem:[%s3 + $0xd8] sm:$0xff]
  %v1130 = vld [vmem:[%s3 + $0xe0] sm:$0xff]
  %v1131 = vld [vmem:[%s3 + $0xe8] sm:$0xff]
  %v1132 = vld [vmem:[%s3 + $0xf0] sm:$0xff]
  %v1133 = vld [vmem:[%s3 + $0xf8] sm:$0xff]
  %v1134 = vld [vmem:[%s3 + $0x100] sm:$0xff]
  %v1135 = vld [vmem:[%s3 + $0x108] sm:$0xff]
  %v1136 = vld [vmem:[%s3 + $0x110] sm:$0xff]
  %v1137 = vld [vmem:[%s3 + $0x118] sm:$0xff]
  %v1138 = vld [vmem:[%s3 + $0x120] sm:$0xff]
  %v1139 = vld [vmem:[%s3 + $0x128] sm:$0xff]
  %v1140 = vld [vmem:[%s3 + $0x130] sm:$0xff]
  %v1141 = vld [vmem:[%s3 + $0x138] sm:$0xff]
  %v1142 = vld [vmem:[%s3 + $0x140] sm:$0xff]
  %v1143 = vld [vmem:[%s3 + $0x148] sm:$0xff]
  %v1144 = vld [vmem:[%s3 + $0x150] sm:$0xff]
  %v1145 = vld [vmem:[%s3 + $0x158] sm:$0xff]
  %v1146 = vld [vmem:[%s3 + $0x160] sm:$0xff]
  %v1147 = vld [vmem:[%s3 + $0x168] sm:$0xff]
  %v1148 = vld [vmem:[%s3 + $0x170] sm:$0xff]
  %v1149 = vld [vmem:[%s3 + $0x178] sm:$0xff]
  %v1150 = vld [vmem:[%s3 + $0x180] sm:$0xff]
  %v1151 = vld [vmem:[%s3 + $0x188] sm:$0xff]
  %v1152 = vld [vmem:[%s3 + $0x190] sm:$0xff]
  %v1153 = vld [vmem:[%s3 + $0x198] sm:$0xff]
  %v1154 = vld [vmem:[%s3 + $0x1a0] sm:$0xff]
  %v1155 = vld [vmem:[%s3 + $0x1a8] sm:$0xff]
  %v1156 = vld [vmem:[%s3 + $0x1b0] sm:$0xff]
  %v1157 = vld [vmem:[%s3 + $0x1b8] sm:$0xff]
  %v1158 = vld [vmem:[%s3 + $0x1c0] sm:$0xff]
  %v1159 = vld [vmem:[%s3 + $0x1c8] sm:$0xff]
  %v1160 = vld [vmem:[%s3 + $0x1d0] sm:$0xff]
  %v1161 = vld [vmem:[%s3 + $0x1d8] sm:$0xff]
  %v1162 = vld [vmem:[%s3 + $0x1e0] sm:$0xff]
  %v1163 = vld [vmem:[%s3 + $0x1e8] sm:$0xff]
  %v1164 = vld [vmem:[%s3 + $0x1f0] sm:$0xff]
  %v1165 = vld [vmem:[%s3 + $0x1f8] sm:$0xff]
  %v1166 = vld [vmem:[%s3 + $0x200] sm:$0xff]
  %v1167 = vld [vmem:[%s3 + $0x208] sm:$0xff]
  %v1168 = vld [vmem:[%s3 + $0x210] sm:$0xff]
  %v1169 = vld [vmem:[%s3 + $0x218] sm:$0xff]
  %v1170 = vld [vmem:[%s3 + $0x220] sm:$0xff]
  %v1171 = vld [vmem:[%s3 + $0x228] sm:$0xff]
  %v1172 = vld [vmem:[%s3 + $0x230] sm:$0xff]
  %v1173 = vld [vmem:[%s3 + $0x238] sm:$0xff]
  %v1174 = vld [vmem:[%s3 + $0x240] sm:$0xff]
  %v1175 = vld [vmem:[%s3 + $0x248] sm:$0xff]
  %v1176 = vld [vmem:[%s3 + $0x250] sm:$0xff]
  %v1177 = vld [vmem:[%s3 + $0x258] sm:$0xff]
  %v1178 = vld [vmem:[%s3 + $0x260] sm:$0xff]
  %v1179 = vld [vmem:[%s3 + $0x268] sm:$0xff]
  %v1180 = vld [vmem:[%s3 + $0x270] sm:$0xff]
  %v1181 = vld [vmem:[%s3 + $0x278] sm:$0xff]
  %v1182 = vld [vmem:[%s3 + $0x280] sm:$0xff]
  %v1183 = vld [vmem:[%s3 + $0x288] sm:$0xff]
  %v1184 = vld [vmem:[%s3 + $0x290] sm:$0xff]
  %v1185 = vld [vmem:[%s3 + $0x298] sm:$0xff]
  %v1186 = vld [vmem:[%s3 + $0x2a0] sm:$0xff]
  %v1187 = vld [vmem:[%s3 + $0x2a8] sm:$0xff]
  %v1188 = vld [vmem:[%s3 + $0x2b0] sm:$0xff]
  %v1189 = vld [vmem:[%s3 + $0x2b8] sm:$0xff]
  %v1190 = vld [vmem:[%s3 + $0x2c0] sm:$0xff]
  %v1191 = vld [vmem:[%s3 + $0x2c8] sm:$0xff]
  %v1192 = vld [vmem:[%s3 + $0x2d0] sm:$0xff]
  %v1193 = vld [vmem:[%s3 + $0x2d8] sm:$0xff]
  %v1194 = vld [vmem:[%s3 + $0x2e0] sm:$0xff]
  %v1195 = vld [vmem:[%s3 + $0x2e8] sm:$0xff]
  %v1196 = vld [vmem:[%s3 + $0x2f0] sm:$0xff]
  %v1197 = vld [vmem:[%s3 + $0x2f8] sm:$0xff]
  %v1198 = vpack.c.bf16 %v1039, %v1038
  %v1199 = vpack.c.bf16 %v1041, %v1040
  %v1200 = vpack.c.bf16 %v1043, %v1042
  %v1201 = vpack.c.bf16 %v1045, %v1044
  %v1202 = vpack.c.bf16 %v1047, %v1046
  %v1203 = vpack.c.bf16 %v1049, %v1048
  %v1204 = vpack.c.bf16 %v1051, %v1050
  %v1205 = vpack.c.bf16 %v1053, %v1052
  %v1206 = vpack.c.bf16 %v1055, %v1054
  %v1207 = vpack.c.bf16 %v1057, %v1056
  %v1208 = vpack.c.bf16 %v1059, %v1058
  %v1209 = vpack.c.bf16 %v1061, %v1060
  %v1210 = vpack.c.bf16 %v1063, %v1062
  %v1211 = vpack.c.bf16 %v1065, %v1064
  %v1212 = vpack.c.bf16 %v1067, %v1066
  %v1213 = vpack.c.bf16 %v1069, %v1068
  %v1214 = vpack.c.bf16 %v1071, %v1070
  %v1215 = vpack.c.bf16 %v1073, %v1072
  %v1216 = vpack.c.bf16 %v1075, %v1074
  %v1217 = vpack.c.bf16 %v1077, %v1076
  %v1218 = vpack.c.bf16 %v1079, %v1078
  %v1219 = vpack.c.bf16 %v1081, %v1080
  %v1220 = vpack.c.bf16 %v1083, %v1082
  %v1221 = vpack.c.bf16 %v1085, %v1084
  %v1222 = vpack.c.bf16 %v1087, %v1086
  %v1223 = vpack.c.bf16 %v1089, %v1088
  %v1224 = vpack.c.bf16 %v1091, %v1090
  %v1225 = vpack.c.bf16 %v1093, %v1092
  %v1226 = vpack.c.bf16 %v1095, %v1094
  %v1227 = vpack.c.bf16 %v1097, %v1096
  %v1228 = vpack.c.bf16 %v1099, %v1098
  %v1229 = vpack.c.bf16 %v1101, %v1100
  %v1230 = vld [vmem:[%s4] sm:$0xff]
  %v1231 = vld [vmem:[%s4 + $0x8] sm:$0xff]
  %v1232 = vld [vmem:[%s4 + $0x10] sm:$0xff]
  %v1233 = vld [vmem:[%s4 + $0x18] sm:$0xff]
  %v1234 = vld [vmem:[%s4 + $0x20] sm:$0xff]
  %v1235 = vld [vmem:[%s4 + $0x28] sm:$0xff]
  %v1236 = vld [vmem:[%s4 + $0x30] sm:$0xff]
  %v1237 = vld [vmem:[%s4 + $0x38] sm:$0xff]
  %v1238 = vld [vmem:[%s4 + $0x40] sm:$0xff]
  %v1239 = vld [vmem:[%s4 + $0x48] sm:$0xff]
  %v1240 = vld [vmem:[%s4 + $0x50] sm:$0xff]
  %v1241 = vld [vmem:[%s4 + $0x58] sm:$0xff]
  %v1242 = vld [vmem:[%s4 + $0x60] sm:$0xff]
  %v1243 = vld [vmem:[%s4 + $0x68] sm:$0xff]
  %v1244 = vld [vmem:[%s4 + $0x70] sm:$0xff]
  %v1245 = vld [vmem:[%s4 + $0x78] sm:$0xff]
  %v1246 = vld [vmem:[%s4 + $0x80] sm:$0xff]
  %v1247 = vld [vmem:[%s4 + $0x88] sm:$0xff]
  %v1248 = vld [vmem:[%s4 + $0x90] sm:$0xff]
  %v1249 = vld [vmem:[%s4 + $0x98] sm:$0xff]
  %v1250 = vld [vmem:[%s4 + $0xa0] sm:$0xff]
  %v1251 = vld [vmem:[%s4 + $0xa8] sm:$0xff]
  %v1252 = vld [vmem:[%s4 + $0xb0] sm:$0xff]
  %v1253 = vld [vmem:[%s4 + $0xb8] sm:$0xff]
  %v1254 = vld [vmem:[%s4 + $0xc0] sm:$0xff]
  %v1255 = vld [vmem:[%s4 + $0xc8] sm:$0xff]
  %v1256 = vld [vmem:[%s4 + $0xd0] sm:$0xff]
  %v1257 = vld [vmem:[%s4 + $0xd8] sm:$0xff]
  %v1258 = vld [vmem:[%s4 + $0xe0] sm:$0xff]
  %v1259 = vld [vmem:[%s4 + $0xe8] sm:$0xff]
  %v1260 = vld [vmem:[%s4 + $0xf0] sm:$0xff]
  %v1261 = vld [vmem:[%s4 + $0xf8] sm:$0xff]
  %v1262 = vld [vmem:[%s4 + $0x100] sm:$0xff]
  %v1263 = vld [vmem:[%s4 + $0x108] sm:$0xff]
  %v1264 = vld [vmem:[%s4 + $0x110] sm:$0xff]
  %v1265 = vld [vmem:[%s4 + $0x118] sm:$0xff]
  %v1266 = vld [vmem:[%s4 + $0x120] sm:$0xff]
  %v1267 = vld [vmem:[%s4 + $0x128] sm:$0xff]
  %v1268 = vld [vmem:[%s4 + $0x130] sm:$0xff]
  %v1269 = vld [vmem:[%s4 + $0x138] sm:$0xff]
  %v1270 = vld [vmem:[%s4 + $0x140] sm:$0xff]
  %v1271 = vld [vmem:[%s4 + $0x148] sm:$0xff]
  %v1272 = vld [vmem:[%s4 + $0x150] sm:$0xff]
  %v1273 = vld [vmem:[%s4 + $0x158] sm:$0xff]
  %v1274 = vld [vmem:[%s4 + $0x160] sm:$0xff]
  %v1275 = vld [vmem:[%s4 + $0x168] sm:$0xff]
  %v1276 = vld [vmem:[%s4 + $0x170] sm:$0xff]
  %v1277 = vld [vmem:[%s4 + $0x178] sm:$0xff]
  %1279 = vset.pattern.permute.xlu0 0
  %1280 = vperm.xlu0 %1279, %v1230
  %v1281 = vpop.permute.xlu0 %1280
  %1284 = vset.pattern.permute.xlu0 0
  %1285 = vperm.xlu0 %1284, %v1231
  %v1286 = vpop.permute.xlu0 %1285
  %1289 = vset.pattern.permute.xlu0 0
  %1290 = vperm.xlu0 %1289, %v1232
  %v1291 = vpop.permute.xlu0 %1290
  %1294 = vset.pattern.permute.xlu0 0
  %1295 = vperm.xlu0 %1294, %v1233
  %v1296 = vpop.permute.xlu0 %1295
  %1299 = vset.pattern.permute.xlu0 0
  %1300 = vperm.xlu0 %1299, %v1234
  %v1301 = vpop.permute.xlu0 %1300
  %1304 = vset.pattern.permute.xlu0 0
  %1305 = vperm.xlu0 %1304, %v1235
  %v1306 = vpop.permute.xlu0 %1305
  %1309 = vset.pattern.permute.xlu0 0
  %1310 = vperm.xlu0 %1309, %v1236
  %v1311 = vpop.permute.xlu0 %1310
  %1314 = vset.pattern.permute.xlu0 0
  %1315 = vperm.xlu0 %1314, %v1237
  %v1316 = vpop.permute.xlu0 %1315
  %1319 = vset.pattern.permute.xlu0 0
  %1320 = vperm.xlu0 %1319, %v1238
  %v1321 = vpop.permute.xlu0 %1320
  %1324 = vset.pattern.permute.xlu0 0
  %1325 = vperm.xlu0 %1324, %v1239
  %v1326 = vpop.permute.xlu0 %1325
  %1329 = vset.pattern.permute.xlu0 0
  %1330 = vperm.xlu0 %1329, %v1240
  %v1331 = vpop.permute.xlu0 %1330
  %1334 = vset.pattern.permute.xlu0 0
  %1335 = vperm.xlu0 %1334, %v1241
  %v1336 = vpop.permute.xlu0 %1335
  %1339 = vset.pattern.permute.xlu0 0
  %1340 = vperm.xlu0 %1339, %v1242
  %v1341 = vpop.permute.xlu0 %1340
  %1344 = vset.pattern.permute.xlu0 0
  %1345 = vperm.xlu0 %1344, %v1243
  %v1346 = vpop.permute.xlu0 %1345
  %1349 = vset.pattern.permute.xlu0 0
  %1350 = vperm.xlu0 %1349, %v1244
  %v1351 = vpop.permute.xlu0 %1350
  %1354 = vset.pattern.permute.xlu0 0
  %1355 = vperm.xlu0 %1354, %v1245
  %v1356 = vpop.permute.xlu0 %1355
  %1359 = vset.pattern.permute.xlu0 0
  %1360 = vperm.xlu0 %1359, %v1246
  %v1361 = vpop.permute.xlu0 %1360
  %1364 = vset.pattern.permute.xlu0 0
  %1365 = vperm.xlu0 %1364, %v1247
  %v1366 = vpop.permute.xlu0 %1365
  %1369 = vset.pattern.permute.xlu0 0
  %1370 = vperm.xlu0 %1369, %v1248
  %v1371 = vpop.permute.xlu0 %1370
  %1374 = vset.pattern.permute.xlu0 0
  %1375 = vperm.xlu0 %1374, %v1249
  %v1376 = vpop.permute.xlu0 %1375
  %1379 = vset.pattern.permute.xlu0 0
  %1380 = vperm.xlu0 %1379, %v1250
  %v1381 = vpop.permute.xlu0 %1380
  %1384 = vset.pattern.permute.xlu0 0
  %1385 = vperm.xlu0 %1384, %v1251
  %v1386 = vpop.permute.xlu0 %1385
  %1389 = vset.pattern.permute.xlu0 0
  %1390 = vperm.xlu0 %1389, %v1252
  %v1391 = vpop.permute.xlu0 %1390
  %1394 = vset.pattern.permute.xlu0 0
  %1395 = vperm.xlu0 %1394, %v1253
  %v1396 = vpop.permute.xlu0 %1395
  %1399 = vset.pattern.permute.xlu0 0
  %1400 = vperm.xlu0 %1399, %v1254
  %v1401 = vpop.permute.xlu0 %1400
  %1404 = vset.pattern.permute.xlu0 0
  %1405 = vperm.xlu0 %1404, %v1255
  %v1406 = vpop.permute.xlu0 %1405
  %1409 = vset.pattern.permute.xlu0 0
  %1410 = vperm.xlu0 %1409, %v1256
  %v1411 = vpop.permute.xlu0 %1410
  %1414 = vset.pattern.permute.xlu0 0
  %1415 = vperm.xlu0 %1414, %v1257
  %v1416 = vpop.permute.xlu0 %1415
  %1419 = vset.pattern.permute.xlu0 0
  %1420 = vperm.xlu0 %1419, %v1258
  %v1421 = vpop.permute.xlu0 %1420
  %1424 = vset.pattern.permute.xlu0 0
  %1425 = vperm.xlu0 %1424, %v1259
  %v1426 = vpop.permute.xlu0 %1425
  %1429 = vset.pattern.permute.xlu0 0
  %1430 = vperm.xlu0 %1429, %v1260
  %v1431 = vpop.permute.xlu0 %1430
  %1434 = vset.pattern.permute.xlu0 0
  %1435 = vperm.xlu0 %1434, %v1261
  %v1436 = vpop.permute.xlu0 %1435
  %1439 = vset.pattern.permute.xlu0 0
  %1440 = vperm.xlu0 %1439, %v1262
  %v1441 = vpop.permute.xlu0 %1440
  %1444 = vset.pattern.permute.xlu0 0
  %1445 = vperm.xlu0 %1444, %v1263
  %v1446 = vpop.permute.xlu0 %1445
  %1449 = vset.pattern.permute.xlu0 0
  %1450 = vperm.xlu0 %1449, %v1264
  %v1451 = vpop.permute.xlu0 %1450
  %1454 = vset.pattern.permute.xlu0 0
  %1455 = vperm.xlu0 %1454, %v1265
  %v1456 = vpop.permute.xlu0 %1455
  %1459 = vset.pattern.permute.xlu0 0
  %1460 = vperm.xlu0 %1459, %v1266
  %v1461 = vpop.permute.xlu0 %1460
  %1464 = vset.pattern.permute.xlu0 0
  %1465 = vperm.xlu0 %1464, %v1267
  %v1466 = vpop.permute.xlu0 %1465
  %1469 = vset.pattern.permute.xlu0 0
  %1470 = vperm.xlu0 %1469, %v1268
  %v1471 = vpop.permute.xlu0 %1470
  %1474 = vset.pattern.permute.xlu0 0
  %1475 = vperm.xlu0 %1474, %v1269
  %v1476 = vpop.permute.xlu0 %1475
  %1479 = vset.pattern.permute.xlu0 0
  %1480 = vperm.xlu0 %1479, %v1270
  %v1481 = vpop.permute.xlu0 %1480
  %1484 = vset.pattern.permute.xlu0 0
  %1485 = vperm.xlu0 %1484, %v1271
  %v1486 = vpop.permute.xlu0 %1485
  %1489 = vset.pattern.permute.xlu0 0
  %1490 = vperm.xlu0 %1489, %v1272
  %v1491 = vpop.permute.xlu0 %1490
  %1494 = vset.pattern.permute.xlu0 0
  %1495 = vperm.xlu0 %1494, %v1273
  %v1496 = vpop.permute.xlu0 %1495
  %1499 = vset.pattern.permute.xlu0 0
  %1500 = vperm.xlu0 %1499, %v1274
  %v1501 = vpop.permute.xlu0 %1500
  %1504 = vset.pattern.permute.xlu0 0
  %1505 = vperm.xlu0 %1504, %v1275
  %v1506 = vpop.permute.xlu0 %1505
  %1509 = vset.pattern.permute.xlu0 0
  %1510 = vperm.xlu0 %1509, %v1276
  %v1511 = vpop.permute.xlu0 %1510
  %1514 = vset.pattern.permute.xlu0 0
  %1515 = vperm.xlu0 %1514, %v1277
  %v1516 = vpop.permute.xlu0 %1515
  %v1614 = vunpack.c.l.b16 %v1102
  %v1615 = vunpack.c.h.b16 %v1102
  %v1616 = vunpack.c.l.b16 %v1103
  %v1617 = vunpack.c.h.b16 %v1103
  %v1618 = vunpack.c.l.b16 %v1104
  %v1619 = vunpack.c.h.b16 %v1104
  %v1620 = vunpack.c.l.b16 %v1105
  %v1621 = vunpack.c.h.b16 %v1105
  %v1622 = vunpack.c.l.b16 %v1106
  %v1623 = vunpack.c.h.b16 %v1106
  %v1624 = vunpack.c.l.b16 %v1107
  %v1625 = vunpack.c.h.b16 %v1107
  %v1626 = vunpack.c.l.b16 %v1108
  %v1627 = vunpack.c.h.b16 %v1108
  %v1628 = vunpack.c.l.b16 %v1109
  %v1629 = vunpack.c.h.b16 %v1109
  %v1630 = vunpack.c.l.b16 %v1110
  %v1631 = vunpack.c.h.b16 %v1110
  %v1632 = vunpack.c.l.b16 %v1111
  %v1633 = vunpack.c.h.b16 %v1111
  %v1634 = vunpack.c.l.b16 %v1112
  %v1635 = vunpack.c.h.b16 %v1112
  %v1636 = vunpack.c.l.b16 %v1113
  %v1637 = vunpack.c.h.b16 %v1113
  %v1638 = vunpack.c.l.b16 %v1114
  %v1639 = vunpack.c.h.b16 %v1114
  %v1640 = vunpack.c.l.b16 %v1115
  %v1641 = vunpack.c.h.b16 %v1115
  %v1642 = vunpack.c.l.b16 %v1116
  %v1643 = vunpack.c.h.b16 %v1116
  %v1644 = vunpack.c.l.b16 %v1117
  %v1645 = vunpack.c.h.b16 %v1117
  %v1646 = vunpack.c.l.b16 %v1118
  %v1647 = vunpack.c.h.b16 %v1118
  %v1648 = vunpack.c.l.b16 %v1119
  %v1649 = vunpack.c.h.b16 %v1119
  %v1650 = vunpack.c.l.b16 %v1120
  %v1651 = vunpack.c.h.b16 %v1120
  %v1652 = vunpack.c.l.b16 %v1121
  %v1653 = vunpack.c.h.b16 %v1121
  %v1654 = vunpack.c.l.b16 %v1122
  %v1655 = vunpack.c.h.b16 %v1122
  %v1656 = vunpack.c.l.b16 %v1123
  %v1657 = vunpack.c.h.b16 %v1123
  %v1658 = vunpack.c.l.b16 %v1124
  %v1659 = vunpack.c.h.b16 %v1124
  %v1660 = vunpack.c.l.b16 %v1125
  %v1661 = vunpack.c.h.b16 %v1125
  %v1662 = vunpack.c.l.b16 %v1126
  %v1663 = vunpack.c.h.b16 %v1126
  %v1664 = vunpack.c.l.b16 %v1127
  %v1665 = vunpack.c.h.b16 %v1127
  %v1666 = vunpack.c.l.b16 %v1128
  %v1667 = vunpack.c.h.b16 %v1128
  %v1668 = vunpack.c.l.b16 %v1129
  %v1669 = vunpack.c.h.b16 %v1129
  %v1670 = vunpack.c.l.b16 %v1130
  %v1671 = vunpack.c.h.b16 %v1130
  %v1672 = vunpack.c.l.b16 %v1131
  %v1673 = vunpack.c.h.b16 %v1131
  %v1674 = vunpack.c.l.b16 %v1132
  %v1675 = vunpack.c.h.b16 %v1132
  %v1676 = vunpack.c.l.b16 %v1133
  %v1677 = vunpack.c.h.b16 %v1133
  %v1678 = vunpack.c.l.b16 %v1134
  %v1679 = vunpack.c.h.b16 %v1134
  %v1680 = vunpack.c.l.b16 %v1135
  %v1681 = vunpack.c.h.b16 %v1135
  %v1682 = vunpack.c.l.b16 %v1136
  %v1683 = vunpack.c.h.b16 %v1136
  %v1684 = vunpack.c.l.b16 %v1137
  %v1685 = vunpack.c.h.b16 %v1137
  %v1686 = vunpack.c.l.b16 %v1138
  %v1687 = vunpack.c.h.b16 %v1138
  %v1688 = vunpack.c.l.b16 %v1139
  %v1689 = vunpack.c.h.b16 %v1139
  %v1690 = vunpack.c.l.b16 %v1140
  %v1691 = vunpack.c.h.b16 %v1140
  %v1692 = vunpack.c.l.b16 %v1141
  %v1693 = vunpack.c.h.b16 %v1141
  %v1694 = vunpack.c.l.b16 %v1142
  %v1695 = vunpack.c.h.b16 %v1142
  %v1696 = vunpack.c.l.b16 %v1143
  %v1697 = vunpack.c.h.b16 %v1143
  %v1698 = vunpack.c.l.b16 %v1144
  %v1699 = vunpack.c.h.b16 %v1144
  %v1700 = vunpack.c.l.b16 %v1145
  %v1701 = vunpack.c.h.b16 %v1145
  %v1702 = vunpack.c.l.b16 %v1146
  %v1703 = vunpack.c.h.b16 %v1146
  %v1704 = vunpack.c.l.b16 %v1147
  %v1705 = vunpack.c.h.b16 %v1147
  %v1706 = vunpack.c.l.b16 %v1148
  %v1707 = vunpack.c.h.b16 %v1148
  %v1708 = vunpack.c.l.b16 %v1149
  %v1709 = vunpack.c.h.b16 %v1149
  %v1710 = vunpack.c.l.b16 %v1150
  %v1711 = vunpack.c.h.b16 %v1150
  %v1712 = vunpack.c.l.b16 %v1151
  %v1713 = vunpack.c.h.b16 %v1151
  %v1714 = vunpack.c.l.b16 %v1152
  %v1715 = vunpack.c.h.b16 %v1152
  %v1716 = vunpack.c.l.b16 %v1153
  %v1717 = vunpack.c.h.b16 %v1153
  %v1718 = vunpack.c.l.b16 %v1154
  %v1719 = vunpack.c.h.b16 %v1154
  %v1720 = vunpack.c.l.b16 %v1155
  %v1721 = vunpack.c.h.b16 %v1155
  %v1722 = vunpack.c.l.b16 %v1156
  %v1723 = vunpack.c.h.b16 %v1156
  %v1724 = vunpack.c.l.b16 %v1157
  %v1725 = vunpack.c.h.b16 %v1157
  %v1726 = vunpack.c.l.b16 %v1158
  %v1727 = vunpack.c.h.b16 %v1158
  %v1728 = vunpack.c.l.b16 %v1159
  %v1729 = vunpack.c.h.b16 %v1159
  %v1730 = vunpack.c.l.b16 %v1160
  %v1731 = vunpack.c.h.b16 %v1160
  %v1732 = vunpack.c.l.b16 %v1161
  %v1733 = vunpack.c.h.b16 %v1161
  %v1734 = vunpack.c.l.b16 %v1162
  %v1735 = vunpack.c.h.b16 %v1162
  %v1736 = vunpack.c.l.b16 %v1163
  %v1737 = vunpack.c.h.b16 %v1163
  %v1738 = vunpack.c.l.b16 %v1164
  %v1739 = vunpack.c.h.b16 %v1164
  %v1740 = vunpack.c.l.b16 %v1165
  %v1741 = vunpack.c.h.b16 %v1165
  %v1742 = vunpack.c.l.b16 %v1166
  %v1743 = vunpack.c.h.b16 %v1166
  %v1744 = vunpack.c.l.b16 %v1167
  %v1745 = vunpack.c.h.b16 %v1167
  %v1746 = vunpack.c.l.b16 %v1168
  %v1747 = vunpack.c.h.b16 %v1168
  %v1748 = vunpack.c.l.b16 %v1169
  %v1749 = vunpack.c.h.b16 %v1169
  %v1750 = vunpack.c.l.b16 %v1170
  %v1751 = vunpack.c.h.b16 %v1170
  %v1752 = vunpack.c.l.b16 %v1171
  %v1753 = vunpack.c.h.b16 %v1171
  %v1754 = vunpack.c.l.b16 %v1172
  %v1755 = vunpack.c.h.b16 %v1172
  %v1756 = vunpack.c.l.b16 %v1173
  %v1757 = vunpack.c.h.b16 %v1173
  %v1758 = vunpack.c.l.b16 %v1174
  %v1759 = vunpack.c.h.b16 %v1174
  %v1760 = vunpack.c.l.b16 %v1175
  %v1761 = vunpack.c.h.b16 %v1175
  %v1762 = vunpack.c.l.b16 %v1176
  %v1763 = vunpack.c.h.b16 %v1176
  %v1764 = vunpack.c.l.b16 %v1177
  %v1765 = vunpack.c.h.b16 %v1177
  %v1766 = vunpack.c.l.b16 %v1178
  %v1767 = vunpack.c.h.b16 %v1178
  %v1768 = vunpack.c.l.b16 %v1179
  %v1769 = vunpack.c.h.b16 %v1179
  %v1770 = vunpack.c.l.b16 %v1180
  %v1771 = vunpack.c.h.b16 %v1180
  %v1772 = vunpack.c.l.b16 %v1181
  %v1773 = vunpack.c.h.b16 %v1181
  %v1774 = vunpack.c.l.b16 %v1182
  %v1775 = vunpack.c.h.b16 %v1182
  %v1776 = vunpack.c.l.b16 %v1183
  %v1777 = vunpack.c.h.b16 %v1183
  %v1778 = vunpack.c.l.b16 %v1184
  %v1779 = vunpack.c.h.b16 %v1184
  %v1780 = vunpack.c.l.b16 %v1185
  %v1781 = vunpack.c.h.b16 %v1185
  %v1782 = vunpack.c.l.b16 %v1186
  %v1783 = vunpack.c.h.b16 %v1186
  %v1784 = vunpack.c.l.b16 %v1187
  %v1785 = vunpack.c.h.b16 %v1187
  %v1786 = vunpack.c.l.b16 %v1188
  %v1787 = vunpack.c.h.b16 %v1188
  %v1788 = vunpack.c.l.b16 %v1189
  %v1789 = vunpack.c.h.b16 %v1189
  %v1790 = vunpack.c.l.b16 %v1190
  %v1791 = vunpack.c.h.b16 %v1190
  %v1792 = vunpack.c.l.b16 %v1191
  %v1793 = vunpack.c.h.b16 %v1191
  %v1794 = vunpack.c.l.b16 %v1192
  %v1795 = vunpack.c.h.b16 %v1192
  %v1796 = vunpack.c.l.b16 %v1193
  %v1797 = vunpack.c.h.b16 %v1193
  %v1798 = vunpack.c.l.b16 %v1194
  %v1799 = vunpack.c.h.b16 %v1194
  %v1800 = vunpack.c.l.b16 %v1195
  %v1801 = vunpack.c.h.b16 %v1195
  %v1802 = vunpack.c.l.b16 %v1196
  %v1803 = vunpack.c.h.b16 %v1196
  %v1804 = vunpack.c.l.b16 %v1197
  %v1805 = vunpack.c.h.b16 %v1197
  %v1806 = vpack.c.b16 %v1618, %v1614
  %v1807 = vpack.c.b16 %v1619, %v1615
  %v1808 = vpack.c.b16 %v1620, %v1616
  %v1809 = vpack.c.b16 %v1621, %v1617
  %v1810 = vpack.c.b16 %v1626, %v1622
  %v1811 = vpack.c.b16 %v1627, %v1623
  %v1812 = vpack.c.b16 %v1628, %v1624
  %v1813 = vpack.c.b16 %v1629, %v1625
  %v1814 = vpack.c.b16 %v1634, %v1630
  %v1815 = vpack.c.b16 %v1635, %v1631
  %v1816 = vpack.c.b16 %v1636, %v1632
  %v1817 = vpack.c.b16 %v1637, %v1633
  %v1818 = vpack.c.b16 %v1642, %v1638
  %v1819 = vpack.c.b16 %v1643, %v1639
  %v1820 = vpack.c.b16 %v1644, %v1640
  %v1821 = vpack.c.b16 %v1645, %v1641
  %v1822 = vpack.c.b16 %v1650, %v1646
  %v1823 = vpack.c.b16 %v1651, %v1647
  %v1824 = vpack.c.b16 %v1652, %v1648
  %v1825 = vpack.c.b16 %v1653, %v1649
  %v1826 = vpack.c.b16 %v1658, %v1654
  %v1827 = vpack.c.b16 %v1659, %v1655
  %v1828 = vpack.c.b16 %v1660, %v1656
  %v1829 = vpack.c.b16 %v1661, %v1657
  %v1830 = vpack.c.b16 %v1666, %v1662
  %v1831 = vpack.c.b16 %v1667, %v1663
  %v1832 = vpack.c.b16 %v1668, %v1664
  %v1833 = vpack.c.b16 %v1669, %v1665
  %v1834 = vpack.c.b16 %v1674, %v1670
  %v1835 = vpack.c.b16 %v1675, %v1671
  %v1836 = vpack.c.b16 %v1676, %v1672
  %v1837 = vpack.c.b16 %v1677, %v1673
  %v1838 = vpack.c.b16 %v1682, %v1678
  %v1839 = vpack.c.b16 %v1683, %v1679
  %v1840 = vpack.c.b16 %v1684, %v1680
  %v1841 = vpack.c.b16 %v1685, %v1681
  %v1842 = vpack.c.b16 %v1690, %v1686
  %v1843 = vpack.c.b16 %v1691, %v1687
  %v1844 = vpack.c.b16 %v1692, %v1688
  %v1845 = vpack.c.b16 %v1693, %v1689
  %v1846 = vpack.c.b16 %v1698, %v1694
  %v1847 = vpack.c.b16 %v1699, %v1695
  %v1848 = vpack.c.b16 %v1700, %v1696
  %v1849 = vpack.c.b16 %v1701, %v1697
  %v1850 = vpack.c.b16 %v1706, %v1702
  %v1851 = vpack.c.b16 %v1707, %v1703
  %v1852 = vpack.c.b16 %v1708, %v1704
  %v1853 = vpack.c.b16 %v1709, %v1705
  %v1854 = vpack.c.b16 %v1714, %v1710
  %v1855 = vpack.c.b16 %v1715, %v1711
  %v1856 = vpack.c.b16 %v1716, %v1712
  %v1857 = vpack.c.b16 %v1717, %v1713
  %v1858 = vpack.c.b16 %v1722, %v1718
  %v1859 = vpack.c.b16 %v1723, %v1719
  %v1860 = vpack.c.b16 %v1724, %v1720
  %v1861 = vpack.c.b16 %v1725, %v1721
  %v1862 = vpack.c.b16 %v1730, %v1726
  %v1863 = vpack.c.b16 %v1731, %v1727
  %v1864 = vpack.c.b16 %v1732, %v1728
  %v1865 = vpack.c.b16 %v1733, %v1729
  %v1866 = vpack.c.b16 %v1738, %v1734
  %v1867 = vpack.c.b16 %v1739, %v1735
  %v1868 = vpack.c.b16 %v1740, %v1736
  %v1869 = vpack.c.b16 %v1741, %v1737
  %v1870 = vpack.c.b16 %v1746, %v1742
  %v1871 = vpack.c.b16 %v1747, %v1743
  %v1872 = vpack.c.b16 %v1748, %v1744
  %v1873 = vpack.c.b16 %v1749, %v1745
  %v1874 = vpack.c.b16 %v1754, %v1750
  %v1875 = vpack.c.b16 %v1755, %v1751
  %v1876 = vpack.c.b16 %v1756, %v1752
  %v1877 = vpack.c.b16 %v1757, %v1753
  %v1878 = vpack.c.b16 %v1762, %v1758
  %v1879 = vpack.c.b16 %v1763, %v1759
  %v1880 = vpack.c.b16 %v1764, %v1760
  %v1881 = vpack.c.b16 %v1765, %v1761
  %v1882 = vpack.c.b16 %v1770, %v1766
  %v1883 = vpack.c.b16 %v1771, %v1767
  %v1884 = vpack.c.b16 %v1772, %v1768
  %v1885 = vpack.c.b16 %v1773, %v1769
  %v1886 = vpack.c.b16 %v1778, %v1774
  %v1887 = vpack.c.b16 %v1779, %v1775
  %v1888 = vpack.c.b16 %v1780, %v1776
  %v1889 = vpack.c.b16 %v1781, %v1777
  %v1890 = vpack.c.b16 %v1786, %v1782
  %v1891 = vpack.c.b16 %v1787, %v1783
  %v1892 = vpack.c.b16 %v1788, %v1784
  %v1893 = vpack.c.b16 %v1789, %v1785
  %v1894 = vpack.c.b16 %v1794, %v1790
  %v1895 = vpack.c.b16 %v1795, %v1791
  %v1896 = vpack.c.b16 %v1796, %v1792
  %v1897 = vpack.c.b16 %v1797, %v1793
  %v1898 = vpack.c.b16 %v1802, %v1798
  %v1899 = vpack.c.b16 %v1803, %v1799
  %v1900 = vpack.c.b16 %v1804, %v1800
  %v1901 = vpack.c.b16 %v1805, %v1801
  %1998 = vmatprep.subr.bf16.mxu0 0
  %1999 = vmatpush1.bf16.msra.mxu0 %v1198
  %2000 = vmatprep.subr.bf16.mxu0 0
  %2001 = vmatpush1.bf16.msra.mxu0 %v1199
  %2002 = vmatprep.subr.bf16.mxu0 0
  %2003 = vmatpush1.bf16.msra.mxu0 %v1200
  %2004 = vmatprep.subr.bf16.mxu0 0
  %2005 = vmatpush1.bf16.msra.mxu0 %v1201
  %2006 = vmatprep.subr.bf16.mxu0 0
  %2007 = vmatpush1.bf16.msra.mxu0 %v1202
  %2008 = vmatprep.subr.bf16.mxu0 0
  %2009 = vmatpush1.bf16.msra.mxu0 %v1203
  %2010 = vmatprep.subr.bf16.mxu0 0
  %2011 = vmatpush1.bf16.msra.mxu0 %v1204
  %2012 = vmatprep.subr.bf16.mxu0 0
  %2013 = vmatpush1.bf16.msra.mxu0 %v1205
  %2014 = vmatprep.subr.bf16.mxu0 0
  %2015 = vmatpush1.bf16.msra.mxu0 %v1206
  %2016 = vmatprep.subr.bf16.mxu0 0
  %2017 = vmatpush1.bf16.msra.mxu0 %v1207
  %2018 = vmatprep.subr.bf16.mxu0 0
  %2019 = vmatpush1.bf16.msra.mxu0 %v1208
  %2020 = vmatprep.subr.bf16.mxu0 0
  %2021 = vmatpush1.bf16.msra.mxu0 %v1209
  %2022 = vmatprep.subr.bf16.mxu0 0
  %2023 = vmatpush1.bf16.msra.mxu0 %v1210
  %2024 = vmatprep.subr.bf16.mxu0 0
  %2025 = vmatpush1.bf16.msra.mxu0 %v1211
  %2026 = vmatprep.subr.bf16.mxu0 0
  %2027 = vmatpush1.bf16.msra.mxu0 %v1212
  %2028 = vmatprep.subr.bf16.mxu0 0
  %2029 = vmatpush1.bf16.msra.mxu0 %v1213
  %2030 = vmatprep.mubr.bf16.mxu0 %v1807
  %2031 = vmatmul.mubr.bf16.gmra.mrb[0].mxu0 %v1806
  %v2032 = vpop.f32.mrb[0].mxu0
  %v2033 = vadd.f32 %v1281, %v2032
  %v2034 = vpop.f32.mrb[0].mxu0
  %v2035 = vpop.f32.mrb[0].mxu0
  %v2036 = vadd.f32 %v1286, %v2035
  %v2037 = vpop.f32.mrb[0].mxu0
  %2038 = vmatprep.mubr.bf16.mxu0 %v1811
  %2039 = vmatmul.mubr.bf16.gmra.mrb[0].mxu0 %v1810
  %v2040 = vpop.f32.mrb[0].mxu0
  %v2041 = vadd.f32 %v1291, %v2040
  %v2042 = vpop.f32.mrb[0].mxu0
  %v2043 = vpop.f32.mrb[0].mxu0
  %v2044 = vadd.f32 %v1296, %v2043
  %v2045 = vpop.f32.mrb[0].mxu0
  %2046 = vmatprep.mubr.bf16.mxu0 %v1815
  %2047 = vmatmul.mubr.bf16.gmra.mrb[0].mxu0 %v1814
  %v2048 = vpop.f32.mrb[0].mxu0
  %v2049 = vadd.f32 %v1301, %v2048
  %v2050 = vpop.f32.mrb[0].mxu0
  %v2051 = vpop.f32.mrb[0].mxu0
  %v2052 = vadd.f32 %v1306, %v2051
  %v2053 = vpop.f32.mrb[0].mxu0
  %2054 = vmatprep.mubr.bf16.mxu0 %v1819
  %2055 = vmatmul.mubr.bf16.gmra.mrb[0].mxu0 %v1818
  %v2056 = vpop.f32.mrb[0].mxu0
  %v2057 = vadd.f32 %v1311, %v2056
  %v2058 = vpop.f32.mrb[0].mxu0
  %v2059 = vpop.f32.mrb[0].mxu0
  %v2060 = vadd.f32 %v1316, %v2059
  %v2061 = vpop.f32.mrb[0].mxu0
  %2062 = vmatprep.mubr.bf16.mxu0 %v1823
  %2063 = vmatmul.mubr.bf16.gmra.mrb[0].mxu0 %v1822
  %v2064 = vpop.f32.mrb[0].mxu0
  %v2065 = vadd.f32 %v1321, %v2064
  %v2066 = vpop.f32.mrb[0].mxu0
  %v2067 = vpop.f32.mrb[0].mxu0
  %v2068 = vadd.f32 %v1326, %v2067
  %v2069 = vpop.f32.mrb[0].mxu0
  %2070 = vmatprep.mubr.bf16.mxu0 %v1827
  %2071 = vmatmul.mubr.bf16.gmra.mrb[0].mxu0 %v1826
  %v2072 = vpop.f32.mrb[0].mxu0
  %v2073 = vadd.f32 %v1331, %v2072
  %v2074 = vpop.f32.mrb[0].mxu0
  %v2075 = vpop.f32.mrb[0].mxu0
  %v2076 = vadd.f32 %v1336, %v2075
  %v2077 = vpop.f32.mrb[0].mxu0
  %2078 = vmatprep.mubr.bf16.mxu0 %v1831
  %2079 = vmatmul.mubr.bf16.gmra.mrb[0].mxu0 %v1830
  %v2080 = vpop.f32.mrb[0].mxu0
  %v2081 = vadd.f32 %v1341, %v2080
  %v2082 = vpop.f32.mrb[0].mxu0
  %v2083 = vpop.f32.mrb[0].mxu0
  %v2084 = vadd.f32 %v1346, %v2083
  %v2085 = vpop.f32.mrb[0].mxu0
  %2086 = vmatprep.mubr.bf16.mxu0 %v1835
  %2087 = vmatmul.mubr.bf16.gmra.mrb[0].mxu0 %v1834
  %v2088 = vpop.f32.mrb[0].mxu0
  %v2089 = vadd.f32 %v1351, %v2088
  %v2090 = vpop.f32.mrb[0].mxu0
  %v2091 = vpop.f32.mrb[0].mxu0
  %v2092 = vadd.f32 %v1356, %v2091
  %v2093 = vpop.f32.mrb[0].mxu0
  %2094 = vmatprep.mubr.bf16.mxu0 %v1839
  %2095 = vmatmul.mubr.bf16.gmra.mrb[0].mxu0 %v1838
  %v2096 = vpop.f32.mrb[0].mxu0
  %v2097 = vadd.f32 %v1361, %v2096
  %v2098 = vpop.f32.mrb[0].mxu0
  %v2099 = vpop.f32.mrb[0].mxu0
  %v2100 = vadd.f32 %v1366, %v2099
  %v2101 = vpop.f32.mrb[0].mxu0
  %2102 = vmatprep.mubr.bf16.mxu0 %v1843
  %2103 = vmatmul.mubr.bf16.gmra.mrb[0].mxu0 %v1842
  %v2104 = vpop.f32.mrb[0].mxu0
  %v2105 = vadd.f32 %v1371, %v2104
  %v2106 = vpop.f32.mrb[0].mxu0
  %v2107 = vpop.f32.mrb[0].mxu0
  %v2108 = vadd.f32 %v1376, %v2107
  %v2109 = vpop.f32.mrb[0].mxu0
  %2110 = vmatprep.mubr.bf16.mxu0 %v1847
  %2111 = vmatmul.mubr.bf16.gmra.mrb[0].mxu0 %v1846
  %v2112 = vpop.f32.mrb[0].mxu0
  %v2113 = vadd.f32 %v1381, %v2112
  %v2114 = vpop.f32.mrb[0].mxu0
  %v2115 = vpop.f32.mrb[0].mxu0
  %v2116 = vadd.f32 %v1386, %v2115
  %v2117 = vpop.f32.mrb[0].mxu0
  %2118 = vmatprep.mubr.bf16.mxu0 %v1851
  %2119 = vmatmul.mubr.bf16.gmra.mrb[0].mxu0 %v1850
  %v2120 = vpop.f32.mrb[0].mxu0
  %v2121 = vadd.f32 %v1391, %v2120
  %v2122 = vpop.f32.mrb[0].mxu0
  %v2123 = vpop.f32.mrb[0].mxu0
  %v2124 = vadd.f32 %v1396, %v2123
  %v2125 = vpop.f32.mrb[0].mxu0
  %2126 = vmatprep.mubr.bf16.mxu0 %v1855
  %2127 = vmatmul.mubr.bf16.gmra.mrb[0].mxu0 %v1854
  %v2128 = vpop.f32.mrb[0].mxu0
  %v2129 = vadd.f32 %v1401, %v2128
  %v2130 = vpop.f32.mrb[0].mxu0
  %v2131 = vpop.f32.mrb[0].mxu0
  %v2132 = vadd.f32 %v1406, %v2131
  %v2133 = vpop.f32.mrb[0].mxu0
  %2134 = vmatprep.mubr.bf16.mxu0 %v1859
  %2135 = vmatmul.mubr.bf16.gmra.mrb[0].mxu0 %v1858
  %v2136 = vpop.f32.mrb[0].mxu0
  %v2137 = vadd.f32 %v1411, %v2136
  %v2138 = vpop.f32.mrb[0].mxu0
  %v2139 = vpop.f32.mrb[0].mxu0
  %v2140 = vadd.f32 %v1416, %v2139
  %v2141 = vpop.f32.mrb[0].mxu0
  %2142 = vmatprep.mubr.bf16.mxu0 %v1863
  %2143 = vmatmul.mubr.bf16.gmra.mrb[0].mxu0 %v1862
  %v2144 = vpop.f32.mrb[0].mxu0
  %v2145 = vadd.f32 %v1421, %v2144
  %v2146 = vpop.f32.mrb[0].mxu0
  %v2147 = vpop.f32.mrb[0].mxu0
  %v2148 = vadd.f32 %v1426, %v2147
  %v2149 = vpop.f32.mrb[0].mxu0
  %2150 = vmatprep.mubr.bf16.mxu0 %v1867
  %2151 = vmatmul.mubr.bf16.gmra.mrb[0].mxu0 %v1866
  %v2152 = vpop.f32.mrb[0].mxu0
  %v2153 = vadd.f32 %v1431, %v2152
  %v2154 = vpop.f32.mrb[0].mxu0
  %v2155 = vpop.f32.mrb[0].mxu0
  %v2156 = vadd.f32 %v1436, %v2155
  %v2157 = vpop.f32.mrb[0].mxu0
  %2158 = vmatprep.mubr.bf16.mxu0 %v1871
  %2159 = vmatmul.mubr.bf16.gmra.mrb[0].mxu0 %v1870
  %v2160 = vpop.f32.mrb[0].mxu0
  %v2161 = vadd.f32 %v1441, %v2160
  %v2162 = vpop.f32.mrb[0].mxu0
  %v2163 = vpop.f32.mrb[0].mxu0
  %v2164 = vadd.f32 %v1446, %v2163
  %v2165 = vpop.f32.mrb[0].mxu0
  %2166 = vmatprep.mubr.bf16.mxu0 %v1875
  %2167 = vmatmul.mubr.bf16.gmra.mrb[0].mxu0 %v1874
  %v2168 = vpop.f32.mrb[0].mxu0
  %v2169 = vadd.f32 %v1451, %v2168
  %v2170 = vpop.f32.mrb[0].mxu0
  %v2171 = vpop.f32.mrb[0].mxu0
  %v2172 = vadd.f32 %v1456, %v2171
  %v2173 = vpop.f32.mrb[0].mxu0
  %2174 = vmatprep.mubr.bf16.mxu0 %v1879
  %2175 = vmatmul.mubr.bf16.gmra.mrb[0].mxu0 %v1878
  %v2176 = vpop.f32.mrb[0].mxu0
  %v2177 = vadd.f32 %v1461, %v2176
  %v2178 = vpop.f32.mrb[0].mxu0
  %v2179 = vpop.f32.mrb[0].mxu0
  %v2180 = vadd.f32 %v1466, %v2179
  %v2181 = vpop.f32.mrb[0].mxu0
  %2182 = vmatprep.mubr.bf16.mxu0 %v1883
  %2183 = vmatmul.mubr.bf16.gmra.mrb[0].mxu0 %v1882
  %v2184 = vpop.f32.mrb[0].mxu0
  %v2185 = vadd.f32 %v1471, %v2184
  %v2186 = vpop.f32.mrb[0].mxu0
  %v2187 = vpop.f32.mrb[0].mxu0
  %v2188 = vadd.f32 %v1476, %v2187
  %v2189 = vpop.f32.mrb[0].mxu0
  %2190 = vmatprep.mubr.bf16.mxu0 %v1887
  %2191 = vmatmul.mubr.bf16.gmra.mrb[0].mxu0 %v1886
  %v2192 = vpop.f32.mrb[0].mxu0
  %v2193 = vadd.f32 %v1481, %v2192
  %v2194 = vpop.f32.mrb[0].mxu0
  %v2195 = vpop.f32.mrb[0].mxu0
  %v2196 = vadd.f32 %v1486, %v2195
  %v2197 = vpop.f32.mrb[0].mxu0
  %2198 = vmatprep.mubr.bf16.mxu0 %v1891
  %2199 = vmatmul.mubr.bf16.gmra.mrb[0].mxu0 %v1890
  %v2200 = vpop.f32.mrb[0].mxu0
  %v2201 = vadd.f32 %v1491, %v2200
  %v2202 = vpop.f32.mrb[0].mxu0
  %v2203 = vpop.f32.mrb[0].mxu0
  %v2204 = vadd.f32 %v1496, %v2203
  %v2205 = vpop.f32.mrb[0].mxu0
  %2206 = vmatprep.mubr.bf16.mxu0 %v1895
  %2207 = vmatmul.mubr.bf16.gmra.mrb[0].mxu0 %v1894
  %v2208 = vpop.f32.mrb[0].mxu0
  %v2209 = vadd.f32 %v1501, %v2208
  %v2210 = vpop.f32.mrb[0].mxu0
  %v2211 = vpop.f32.mrb[0].mxu0
  %v2212 = vadd.f32 %v1506, %v2211
  %v2213 = vpop.f32.mrb[0].mxu0
  %2214 = vmatprep.mubr.bf16.mxu0 %v1899
  %2215 = vmatmul.mubr.bf16.gmra.mrb[0].mxu0 %v1898
  %v2216 = vpop.f32.mrb[0].mxu0
  %v2217 = vadd.f32 %v1511, %v2216
  %v2218 = vpop.f32.mrb[0].mxu0
  %v2219 = vpop.f32.mrb[0].mxu0
  %v2220 = vadd.f32 %v1516, %v2219
  %v2221 = vpop.f32.mrb[0].mxu0
  %2222 = vdwg.mxu0
  %2223 = vmatprep.subr.bf16.mxu0 0
  %2224 = vmatpush1.bf16.msra.mxu0 %v1214
  %2225 = vmatprep.subr.bf16.mxu0 0
  %2226 = vmatpush1.bf16.msra.mxu0 %v1215
  %2227 = vmatprep.subr.bf16.mxu0 0
  %2228 = vmatpush1.bf16.msra.mxu0 %v1216
  %2229 = vmatprep.subr.bf16.mxu0 0
  %2230 = vmatpush1.bf16.msra.mxu0 %v1217
  %2231 = vmatprep.subr.bf16.mxu0 0
  %2232 = vmatpush1.bf16.msra.mxu0 %v1218
  %2233 = vmatprep.subr.bf16.mxu0 0
  %2234 = vmatpush1.bf16.msra.mxu0 %v1219
  %2235 = vmatprep.subr.bf16.mxu0 0
  %2236 = vmatpush1.bf16.msra.mxu0 %v1220
  %2237 = vmatprep.subr.bf16.mxu0 0
  %2238 = vmatpush1.bf16.msra.mxu0 %v1221
  %2239 = vmatprep.subr.bf16.mxu0 0
  %2240 = vmatpush1.bf16.msra.mxu0 %v1222
  %2241 = vmatprep.subr.bf16.mxu0 0
  %2242 = vmatpush1.bf16.msra.mxu0 %v1223
  %2243 = vmatprep.subr.bf16.mxu0 0
  %2244 = vmatpush1.bf16.msra.mxu0 %v1224
  %2245 = vmatprep.subr.bf16.mxu0 0
  %2246 = vmatpush1.bf16.msra.mxu0 %v1225
  %2247 = vmatprep.subr.bf16.mxu0 0
  %2248 = vmatpush1.bf16.msra.mxu0 %v1226
  %2249 = vmatprep.subr.bf16.mxu0 0
  %2250 = vmatpush1.bf16.msra.mxu0 %v1227
  %2251 = vmatprep.subr.bf16.mxu0 0
  %2252 = vmatpush1.bf16.msra.mxu0 %v1228
  %2253 = vmatprep.subr.bf16.mxu0 0
  %2254 = vmatpush1.bf16.msra.mxu0 %v1229
  %2255 = vmatprep.mubr.bf16.mxu0 %v1809
  %2256 = vmatmul.mubr.bf16.gmra.mrb[0].mxu0 %v1808
  %v2257 = vpop.f32.mrb[0].mxu0
  %v2258 = vadd.f32 %v2033, %v2257
  %v2259 = vpop.f32.mrb[0].mxu0
  %v2260 = vpop.f32.mrb[0].mxu0
  %v2261 = vadd.f32 %v2036, %v2260
  %v2262 = vpop.f32.mrb[0].mxu0
  %2263 = vmatprep.mubr.bf16.mxu0 %v1813
  %2264 = vmatmul.mubr.bf16.gmra.mrb[0].mxu0 %v1812
  %v2265 = vpop.f32.mrb[0].mxu0
  %v2266 = vadd.f32 %v2041, %v2265
  %v2267 = vpop.f32.mrb[0].mxu0
  %v2268 = vpop.f32.mrb[0].mxu0
  %v2269 = vadd.f32 %v2044, %v2268
  %v2270 = vpop.f32.mrb[0].mxu0
  %2271 = vmatprep.mubr.bf16.mxu0 %v1817
  %2272 = vmatmul.mubr.bf16.gmra.mrb[0].mxu0 %v1816
  %v2273 = vpop.f32.mrb[0].mxu0
  %v2274 = vadd.f32 %v2049, %v2273
  %v2275 = vpop.f32.mrb[0].mxu0
  %v2276 = vpop.f32.mrb[0].mxu0
  %v2277 = vadd.f32 %v2052, %v2276
  %v2278 = vpop.f32.mrb[0].mxu0
  %2279 = vmatprep.mubr.bf16.mxu0 %v1821
  %2280 = vmatmul.mubr.bf16.gmra.mrb[0].mxu0 %v1820
  %v2281 = vpop.f32.mrb[0].mxu0
  %v2282 = vadd.f32 %v2057, %v2281
  %v2283 = vpop.f32.mrb[0].mxu0
  %v2284 = vpop.f32.mrb[0].mxu0
  %v2285 = vadd.f32 %v2060, %v2284
  %v2286 = vpop.f32.mrb[0].mxu0
  %2287 = vmatprep.mubr.bf16.mxu0 %v1825
  %2288 = vmatmul.mubr.bf16.gmra.mrb[0].mxu0 %v1824
  %v2289 = vpop.f32.mrb[0].mxu0
  %v2290 = vadd.f32 %v2065, %v2289
  %v2291 = vpop.f32.mrb[0].mxu0
  %v2292 = vpop.f32.mrb[0].mxu0
  %v2293 = vadd.f32 %v2068, %v2292
  %v2294 = vpop.f32.mrb[0].mxu0
  %2295 = vmatprep.mubr.bf16.mxu0 %v1829
  %2296 = vmatmul.mubr.bf16.gmra.mrb[0].mxu0 %v1828
  %v2297 = vpop.f32.mrb[0].mxu0
  %v2298 = vadd.f32 %v2073, %v2297
  %v2299 = vpop.f32.mrb[0].mxu0
  %v2300 = vpop.f32.mrb[0].mxu0
  %v2301 = vadd.f32 %v2076, %v2300
  %v2302 = vpop.f32.mrb[0].mxu0
  %2303 = vmatprep.mubr.bf16.mxu0 %v1833
  %2304 = vmatmul.mubr.bf16.gmra.mrb[0].mxu0 %v1832
  %v2305 = vpop.f32.mrb[0].mxu0
  %v2306 = vadd.f32 %v2081, %v2305
  %v2307 = vpop.f32.mrb[0].mxu0
  %v2308 = vpop.f32.mrb[0].mxu0
  %v2309 = vadd.f32 %v2084, %v2308
  %v2310 = vpop.f32.mrb[0].mxu0
  %2311 = vmatprep.mubr.bf16.mxu0 %v1837
  %2312 = vmatmul.mubr.bf16.gmra.mrb[0].mxu0 %v1836
  %v2313 = vpop.f32.mrb[0].mxu0
  %v2314 = vadd.f32 %v2089, %v2313
  %v2315 = vpop.f32.mrb[0].mxu0
  %v2316 = vpop.f32.mrb[0].mxu0
  %v2317 = vadd.f32 %v2092, %v2316
  %v2318 = vpop.f32.mrb[0].mxu0
  %2319 = vmatprep.mubr.bf16.mxu0 %v1841
  %2320 = vmatmul.mubr.bf16.gmra.mrb[0].mxu0 %v1840
  %v2321 = vpop.f32.mrb[0].mxu0
  %v2322 = vadd.f32 %v2097, %v2321
  %v2323 = vpop.f32.mrb[0].mxu0
  %v2324 = vpop.f32.mrb[0].mxu0
  %v2325 = vadd.f32 %v2100, %v2324
  %v2326 = vpop.f32.mrb[0].mxu0
  %2327 = vmatprep.mubr.bf16.mxu0 %v1845
  %2328 = vmatmul.mubr.bf16.gmra.mrb[0].mxu0 %v1844
  %v2329 = vpop.f32.mrb[0].mxu0
  %v2330 = vadd.f32 %v2105, %v2329
  %v2331 = vpop.f32.mrb[0].mxu0
  %v2332 = vpop.f32.mrb[0].mxu0
  %v2333 = vadd.f32 %v2108, %v2332
  %v2334 = vpop.f32.mrb[0].mxu0
  %2335 = vmatprep.mubr.bf16.mxu0 %v1849
  %2336 = vmatmul.mubr.bf16.gmra.mrb[0].mxu0 %v1848
  %v2337 = vpop.f32.mrb[0].mxu0
  %v2338 = vadd.f32 %v2113, %v2337
  %v2339 = vpop.f32.mrb[0].mxu0
  %v2340 = vpop.f32.mrb[0].mxu0
  %v2341 = vadd.f32 %v2116, %v2340
  %v2342 = vpop.f32.mrb[0].mxu0
  %2343 = vmatprep.mubr.bf16.mxu0 %v1853
  %2344 = vmatmul.mubr.bf16.gmra.mrb[0].mxu0 %v1852
  %v2345 = vpop.f32.mrb[0].mxu0
  %v2346 = vadd.f32 %v2121, %v2345
  %v2347 = vpop.f32.mrb[0].mxu0
  %v2348 = vpop.f32.mrb[0].mxu0
  %v2349 = vadd.f32 %v2124, %v2348
  %v2350 = vpop.f32.mrb[0].mxu0
  %2351 = vmatprep.mubr.bf16.mxu0 %v1857
  %2352 = vmatmul.mubr.bf16.gmra.mrb[0].mxu0 %v1856
  %v2353 = vpop.f32.mrb[0].mxu0
  %v2354 = vadd.f32 %v2129, %v2353
  %v2355 = vpop.f32.mrb[0].mxu0
  %v2356 = vpop.f32.mrb[0].mxu0
  %v2357 = vadd.f32 %v2132, %v2356
  %v2358 = vpop.f32.mrb[0].mxu0
  %2359 = vmatprep.mubr.bf16.mxu0 %v1861
  %2360 = vmatmul.mubr.bf16.gmra.mrb[0].mxu0 %v1860
  %v2361 = vpop.f32.mrb[0].mxu0
  %v2362 = vadd.f32 %v2137, %v2361
  %v2363 = vpop.f32.mrb[0].mxu0
  %v2364 = vpop.f32.mrb[0].mxu0
  %v2365 = vadd.f32 %v2140, %v2364
  %v2366 = vpop.f32.mrb[0].mxu0
  %2367 = vmatprep.mubr.bf16.mxu0 %v1865
  %2368 = vmatmul.mubr.bf16.gmra.mrb[0].mxu0 %v1864
  %v2369 = vpop.f32.mrb[0].mxu0
  %v2370 = vadd.f32 %v2145, %v2369
  %v2371 = vpop.f32.mrb[0].mxu0
  %v2372 = vpop.f32.mrb[0].mxu0
  %v2373 = vadd.f32 %v2148, %v2372
  %v2374 = vpop.f32.mrb[0].mxu0
  %2375 = vmatprep.mubr.bf16.mxu0 %v1869
  %2376 = vmatmul.mubr.bf16.gmra.mrb[0].mxu0 %v1868
  %v2377 = vpop.f32.mrb[0].mxu0
  %v2378 = vadd.f32 %v2153, %v2377
  %v2379 = vpop.f32.mrb[0].mxu0
  %v2380 = vpop.f32.mrb[0].mxu0
  %v2381 = vadd.f32 %v2156, %v2380
  %v2382 = vpop.f32.mrb[0].mxu0
  %2383 = vmatprep.mubr.bf16.mxu0 %v1873
  %2384 = vmatmul.mubr.bf16.gmra.mrb[0].mxu0 %v1872
  %v2385 = vpop.f32.mrb[0].mxu0
  %v2386 = vadd.f32 %v2161, %v2385
  %v2387 = vpop.f32.mrb[0].mxu0
  %v2388 = vpop.f32.mrb[0].mxu0
  %v2389 = vadd.f32 %v2164, %v2388
  %v2390 = vpop.f32.mrb[0].mxu0
  %2391 = vmatprep.mubr.bf16.mxu0 %v1877
  %2392 = vmatmul.mubr.bf16.gmra.mrb[0].mxu0 %v1876
  %v2393 = vpop.f32.mrb[0].mxu0
  %v2394 = vadd.f32 %v2169, %v2393
  %v2395 = vpop.f32.mrb[0].mxu0
  %v2396 = vpop.f32.mrb[0].mxu0
  %v2397 = vadd.f32 %v2172, %v2396
  %v2398 = vpop.f32.mrb[0].mxu0
  %2399 = vmatprep.mubr.bf16.mxu0 %v1881
  %2400 = vmatmul.mubr.bf16.gmra.mrb[0].mxu0 %v1880
  %v2401 = vpop.f32.mrb[0].mxu0
  %v2402 = vadd.f32 %v2177, %v2401
  %v2403 = vpop.f32.mrb[0].mxu0
  %v2404 = vpop.f32.mrb[0].mxu0
  %v2405 = vadd.f32 %v2180, %v2404
  %v2406 = vpop.f32.mrb[0].mxu0
  %2407 = vmatprep.mubr.bf16.mxu0 %v1885
  %2408 = vmatmul.mubr.bf16.gmra.mrb[0].mxu0 %v1884
  %v2409 = vpop.f32.mrb[0].mxu0
  %v2410 = vadd.f32 %v2185, %v2409
  %v2411 = vpop.f32.mrb[0].mxu0
  %v2412 = vpop.f32.mrb[0].mxu0
  %v2413 = vadd.f32 %v2188, %v2412
  %v2414 = vpop.f32.mrb[0].mxu0
  %2415 = vmatprep.mubr.bf16.mxu0 %v1889
  %2416 = vmatmul.mubr.bf16.gmra.mrb[0].mxu0 %v1888
  %v2417 = vpop.f32.mrb[0].mxu0
  %v2418 = vadd.f32 %v2193, %v2417
  %v2419 = vpop.f32.mrb[0].mxu0
  %v2420 = vpop.f32.mrb[0].mxu0
  %v2421 = vadd.f32 %v2196, %v2420
  %v2422 = vpop.f32.mrb[0].mxu0
  %2423 = vmatprep.mubr.bf16.mxu0 %v1893
  %2424 = vmatmul.mubr.bf16.gmra.mrb[0].mxu0 %v1892
  %v2425 = vpop.f32.mrb[0].mxu0
  %v2426 = vadd.f32 %v2201, %v2425
  %v2427 = vpop.f32.mrb[0].mxu0
  %v2428 = vpop.f32.mrb[0].mxu0
  %v2429 = vadd.f32 %v2204, %v2428
  %v2430 = vpop.f32.mrb[0].mxu0
  %2431 = vmatprep.mubr.bf16.mxu0 %v1897
  %2432 = vmatmul.mubr.bf16.gmra.mrb[0].mxu0 %v1896
  %v2433 = vpop.f32.mrb[0].mxu0
  %v2434 = vadd.f32 %v2209, %v2433
  %v2435 = vpop.f32.mrb[0].mxu0
  %v2436 = vpop.f32.mrb[0].mxu0
  %v2437 = vadd.f32 %v2212, %v2436
  %v2438 = vpop.f32.mrb[0].mxu0
  %2439 = vmatprep.mubr.bf16.mxu0 %v1901
  %2440 = vmatmul.mubr.bf16.gmra.mrb[0].mxu0 %v1900
  %v2441 = vpop.f32.mrb[0].mxu0
  %v2442 = vadd.f32 %v2217, %v2441
  %v2443 = vpop.f32.mrb[0].mxu0
  %v2444 = vpop.f32.mrb[0].mxu0
  %v2445 = vadd.f32 %v2220, %v2444
  %v2446 = vpop.f32.mrb[0].mxu0
  %2447 = vdwg.mxu0
  %v2448 = vmax.f32 %v2258, 0.0
  %v2449 = vmax.f32 %v2261, 0.0
  %v2450 = vmax.f32 %v2266, 0.0
  %v2451 = vmax.f32 %v2269, 0.0
  %v2452 = vmax.f32 %v2274, 0.0
  %v2453 = vmax.f32 %v2277, 0.0
  %v2454 = vmax.f32 %v2282, 0.0
  %v2455 = vmax.f32 %v2285, 0.0
  %v2456 = vmax.f32 %v2290, 0.0
  %v2457 = vmax.f32 %v2293, 0.0
  %v2458 = vmax.f32 %v2298, 0.0
  %v2459 = vmax.f32 %v2301, 0.0
  %v2460 = vmax.f32 %v2306, 0.0
  %v2461 = vmax.f32 %v2309, 0.0
  %v2462 = vmax.f32 %v2314, 0.0
  %v2463 = vmax.f32 %v2317, 0.0
  %v2464 = vmax.f32 %v2322, 0.0
  %v2465 = vmax.f32 %v2325, 0.0
  %v2466 = vmax.f32 %v2330, 0.0
  %v2467 = vmax.f32 %v2333, 0.0
  %v2468 = vmax.f32 %v2338, 0.0
  %v2469 = vmax.f32 %v2341, 0.0
  %v2470 = vmax.f32 %v2346, 0.0
  %v2471 = vmax.f32 %v2349, 0.0
  %v2472 = vmax.f32 %v2354, 0.0
  %v2473 = vmax.f32 %v2357, 0.0
  %v2474 = vmax.f32 %v2362, 0.0
  %v2475 = vmax.f32 %v2365, 0.0
  %v2476 = vmax.f32 %v2370, 0.0
  %v2477 = vmax.f32 %v2373, 0.0
  %v2478 = vmax.f32 %v2378, 0.0
  %v2479 = vmax.f32 %v2381, 0.0
  %v2480 = vmax.f32 %v2386, 0.0
  %v2481 = vmax.f32 %v2389, 0.0
  %v2482 = vmax.f32 %v2394, 0.0
  %v2483 = vmax.f32 %v2397, 0.0
  %v2484 = vmax.f32 %v2402, 0.0
  %v2485 = vmax.f32 %v2405, 0.0
  %v2486 = vmax.f32 %v2410, 0.0
  %v2487 = vmax.f32 %v2413, 0.0
  %v2488 = vmax.f32 %v2418, 0.0
  %v2489 = vmax.f32 %v2421, 0.0
  %v2490 = vmax.f32 %v2426, 0.0
  %v2491 = vmax.f32 %v2429, 0.0
  %v2492 = vmax.f32 %v2434, 0.0
  %v2493 = vmax.f32 %v2437, 0.0
  %v2494 = vmax.f32 %v2442, 0.0
  %v2495 = vmax.f32 %v2445, 0.0
  %v2496 = vld [vmem:[%s5] sm:$0xff]
  %v2497 = vld [vmem:[%s5 + $0x8] sm:$0xff]
  %v2498 = vld [vmem:[%s5 + $0x10] sm:$0xff]
  %v2499 = vld [vmem:[%s5 + $0x18] sm:$0xff]
  %v2500 = vld [vmem:[%s5 + $0x20] sm:$0xff]
  %v2501 = vld [vmem:[%s5 + $0x28] sm:$0xff]
  %v2502 = vld [vmem:[%s5 + $0x30] sm:$0xff]
  %v2503 = vld [vmem:[%s5 + $0x38] sm:$0xff]
  %v2504 = vld [vmem:[%s5 + $0x40] sm:$0xff]
  %v2505 = vld [vmem:[%s5 + $0x48] sm:$0xff]
  %v2506 = vld [vmem:[%s5 + $0x50] sm:$0xff]
  %v2507 = vld [vmem:[%s5 + $0x58] sm:$0xff]
  %v2508 = vld [vmem:[%s5 + $0x60] sm:$0xff]
  %v2509 = vld [vmem:[%s5 + $0x68] sm:$0xff]
  %v2510 = vld [vmem:[%s5 + $0x70] sm:$0xff]
  %v2511 = vld [vmem:[%s5 + $0x78] sm:$0xff]
  %v2512 = vld [vmem:[%s5 + $0x80] sm:$0xff]
  %v2513 = vld [vmem:[%s5 + $0x88] sm:$0xff]
  %v2514 = vld [vmem:[%s5 + $0x90] sm:$0xff]
  %v2515 = vld [vmem:[%s5 + $0x98] sm:$0xff]
  %v2516 = vld [vmem:[%s5 + $0xa0] sm:$0xff]
  %v2517 = vld [vmem:[%s5 + $0xa8] sm:$0xff]
  %v2518 = vld [vmem:[%s5 + $0xb0] sm:$0xff]
  %v2519 = vld [vmem:[%s5 + $0xb8] sm:$0xff]
  %v2520 = vld [vmem:[%s5 + $0xc0] sm:$0xff]
  %v2521 = vld [vmem:[%s5 + $0xc8] sm:$0xff]
  %v2522 = vld [vmem:[%s5 + $0xd0] sm:$0xff]
  %v2523 = vld [vmem:[%s5 + $0xd8] sm:$0xff]
  %v2524 = vld [vmem:[%s5 + $0xe0] sm:$0xff]
  %v2525 = vld [vmem:[%s5 + $0xe8] sm:$0xff]
  %v2526 = vld [vmem:[%s5 + $0xf0] sm:$0xff]
  %v2527 = vld [vmem:[%s5 + $0xf8] sm:$0xff]
  %v2528 = vld [vmem:[%s5 + $0x100] sm:$0xff]
  %v2529 = vld [vmem:[%s5 + $0x108] sm:$0xff]
  %v2530 = vld [vmem:[%s5 + $0x110] sm:$0xff]
  %v2531 = vld [vmem:[%s5 + $0x118] sm:$0xff]
  %v2532 = vld [vmem:[%s5 + $0x120] sm:$0xff]
  %v2533 = vld [vmem:[%s5 + $0x128] sm:$0xff]
  %v2534 = vld [vmem:[%s5 + $0x130] sm:$0xff]
  %v2535 = vld [vmem:[%s5 + $0x138] sm:$0xff]
  %v2536 = vld [vmem:[%s5 + $0x140] sm:$0xff]
  %v2537 = vld [vmem:[%s5 + $0x148] sm:$0xff]
  %v2538 = vld [vmem:[%s5 + $0x150] sm:$0xff]
  %v2539 = vld [vmem:[%s5 + $0x158] sm:$0xff]
  %v2540 = vld [vmem:[%s5 + $0x160] sm:$0xff]
  %v2541 = vld [vmem:[%s5 + $0x168] sm:$0xff]
  %v2542 = vld [vmem:[%s5 + $0x170] sm:$0xff]
  %v2543 = vld [vmem:[%s5 + $0x178] sm:$0xff]
  %2545 = vset.pattern.permute.xlu0 0
  %2546 = vperm.xlu0 %2545, %v2496
  %v2547 = vpop.permute.xlu0 %2546
  %2550 = vset.pattern.permute.xlu0 0
  %2551 = vperm.xlu0 %2550, %v2497
  %v2552 = vpop.permute.xlu0 %2551
  %2555 = vset.pattern.permute.xlu0 0
  %2556 = vperm.xlu0 %2555, %v2498
  %v2557 = vpop.permute.xlu0 %2556
  %2560 = vset.pattern.permute.xlu0 0
  %2561 = vperm.xlu0 %2560, %v2499
  %v2562 = vpop.permute.xlu0 %2561
  %2565 = vset.pattern.permute.xlu0 0
  %2566 = vperm.xlu0 %2565, %v2500
  %v2567 = vpop.permute.xlu0 %2566
  %2570 = vset.pattern.permute.xlu0 0
  %2571 = vperm.xlu0 %2570, %v2501
  %v2572 = vpop.permute.xlu0 %2571
  %2575 = vset.pattern.permute.xlu0 0
  %2576 = vperm.xlu0 %2575, %v2502
  %v2577 = vpop.permute.xlu0 %2576
  %2580 = vset.pattern.permute.xlu0 0
  %2581 = vperm.xlu0 %2580, %v2503
  %v2582 = vpop.permute.xlu0 %2581
  %2585 = vset.pattern.permute.xlu0 0
  %2586 = vperm.xlu0 %2585, %v2504
  %v2587 = vpop.permute.xlu0 %2586
  %2590 = vset.pattern.permute.xlu0 0
  %2591 = vperm.xlu0 %2590, %v2505
  %v2592 = vpop.permute.xlu0 %2591
  %2595 = vset.pattern.permute.xlu0 0
  %2596 = vperm.xlu0 %2595, %v2506
  %v2597 = vpop.permute.xlu0 %2596
  %2600 = vset.pattern.permute.xlu0 0
  %2601 = vperm.xlu0 %2600, %v2507
  %v2602 = vpop.permute.xlu0 %2601
  %2605 = vset.pattern.permute.xlu0 0
  %2606 = vperm.xlu0 %2605, %v2508
  %v2607 = vpop.permute.xlu0 %2606
  %2610 = vset.pattern.permute.xlu0 0
  %2611 = vperm.xlu0 %2610, %v2509
  %v2612 = vpop.permute.xlu0 %2611
  %2615 = vset.pattern.permute.xlu0 0
  %2616 = vperm.xlu0 %2615, %v2510
  %v2617 = vpop.permute.xlu0 %2616
  %2620 = vset.pattern.permute.xlu0 0
  %2621 = vperm.xlu0 %2620, %v2511
  %v2622 = vpop.permute.xlu0 %2621
  %2625 = vset.pattern.permute.xlu0 0
  %2626 = vperm.xlu0 %2625, %v2512
  %v2627 = vpop.permute.xlu0 %2626
  %2630 = vset.pattern.permute.xlu0 0
  %2631 = vperm.xlu0 %2630, %v2513
  %v2632 = vpop.permute.xlu0 %2631
  %2635 = vset.pattern.permute.xlu0 0
  %2636 = vperm.xlu0 %2635, %v2514
  %v2637 = vpop.permute.xlu0 %2636
  %2640 = vset.pattern.permute.xlu0 0
  %2641 = vperm.xlu0 %2640, %v2515
  %v2642 = vpop.permute.xlu0 %2641
  %2645 = vset.pattern.permute.xlu0 0
  %2646 = vperm.xlu0 %2645, %v2516
  %v2647 = vpop.permute.xlu0 %2646
  %2650 = vset.pattern.permute.xlu0 0
  %2651 = vperm.xlu0 %2650, %v2517
  %v2652 = vpop.permute.xlu0 %2651
  %2655 = vset.pattern.permute.xlu0 0
  %2656 = vperm.xlu0 %2655, %v2518
  %v2657 = vpop.permute.xlu0 %2656
  %2660 = vset.pattern.permute.xlu0 0
  %2661 = vperm.xlu0 %2660, %v2519
  %v2662 = vpop.permute.xlu0 %2661
  %2665 = vset.pattern.permute.xlu0 0
  %2666 = vperm.xlu0 %2665, %v2520
  %v2667 = vpop.permute.xlu0 %2666
  %2670 = vset.pattern.permute.xlu0 0
  %2671 = vperm.xlu0 %2670, %v2521
  %v2672 = vpop.permute.xlu0 %2671
  %2675 = vset.pattern.permute.xlu0 0
  %2676 = vperm.xlu0 %2675, %v2522
  %v2677 = vpop.permute.xlu0 %2676
  %2680 = vset.pattern.permute.xlu0 0
  %2681 = vperm.xlu0 %2680, %v2523
  %v2682 = vpop.permute.xlu0 %2681
  %2685 = vset.pattern.permute.xlu0 0
  %2686 = vperm.xlu0 %2685, %v2524
  %v2687 = vpop.permute.xlu0 %2686
  %2690 = vset.pattern.permute.xlu0 0
  %2691 = vperm.xlu0 %2690, %v2525
  %v2692 = vpop.permute.xlu0 %2691
  %2695 = vset.pattern.permute.xlu0 0
  %2696 = vperm.xlu0 %2695, %v2526
  %v2697 = vpop.permute.xlu0 %2696
  %2700 = vset.pattern.permute.xlu0 0
  %2701 = vperm.xlu0 %2700, %v2527
  %v2702 = vpop.permute.xlu0 %2701
  %2705 = vset.pattern.permute.xlu0 0
  %2706 = vperm.xlu0 %2705, %v2528
  %v2707 = vpop.permute.xlu0 %2706
  %2710 = vset.pattern.permute.xlu0 0
  %2711 = vperm.xlu0 %2710, %v2529
  %v2712 = vpop.permute.xlu0 %2711
  %2715 = vset.pattern.permute.xlu0 0
  %2716 = vperm.xlu0 %2715, %v2530
  %v2717 = vpop.permute.xlu0 %2716
  %2720 = vset.pattern.permute.xlu0 0
  %2721 = vperm.xlu0 %2720, %v2531
  %v2722 = vpop.permute.xlu0 %2721
  %2725 = vset.pattern.permute.xlu0 0
  %2726 = vperm.xlu0 %2725, %v2532
  %v2727 = vpop.permute.xlu0 %2726
  %2730 = vset.pattern.permute.xlu0 0
  %2731 = vperm.xlu0 %2730, %v2533
  %v2732 = vpop.permute.xlu0 %2731
  %2735 = vset.pattern.permute.xlu0 0
  %2736 = vperm.xlu0 %2735, %v2534
  %v2737 = vpop.permute.xlu0 %2736
  %2740 = vset.pattern.permute.xlu0 0
  %2741 = vperm.xlu0 %2740, %v2535
  %v2742 = vpop.permute.xlu0 %2741
  %2745 = vset.pattern.permute.xlu0 0
  %2746 = vperm.xlu0 %2745, %v2536
  %v2747 = vpop.permute.xlu0 %2746
  %2750 = vset.pattern.permute.xlu0 0
  %2751 = vperm.xlu0 %2750, %v2537
  %v2752 = vpop.permute.xlu0 %2751
  %2755 = vset.pattern.permute.xlu0 0
  %2756 = vperm.xlu0 %2755, %v2538
  %v2757 = vpop.permute.xlu0 %2756
  %2760 = vset.pattern.permute.xlu0 0
  %2761 = vperm.xlu0 %2760, %v2539
  %v2762 = vpop.permute.xlu0 %2761
  %2765 = vset.pattern.permute.xlu0 0
  %2766 = vperm.xlu0 %2765, %v2540
  %v2767 = vpop.permute.xlu0 %2766
  %2770 = vset.pattern.permute.xlu0 0
  %2771 = vperm.xlu0 %2770, %v2541
  %v2772 = vpop.permute.xlu0 %2771
  %2775 = vset.pattern.permute.xlu0 0
  %2776 = vperm.xlu0 %2775, %v2542
  %v2777 = vpop.permute.xlu0 %2776
  %2780 = vset.pattern.permute.xlu0 0
  %2781 = vperm.xlu0 %2780, %v2543
  %v2782 = vpop.permute.xlu0 %2781
  %v2784 = vmul.f32 %v2448, %v2547
  %v2785 = vmul.f32 %v2449, %v2552
  %v2786 = vmul.f32 %v2450, %v2557
  %v2787 = vmul.f32 %v2451, %v2562
  %v2788 = vmul.f32 %v2452, %v2567
  %v2789 = vmul.f32 %v2453, %v2572
  %v2790 = vmul.f32 %v2454, %v2577
  %v2791 = vmul.f32 %v2455, %v2582
  %v2792 = vmul.f32 %v2456, %v2587
  %v2793 = vmul.f32 %v2457, %v2592
  %v2794 = vmul.f32 %v2458, %v2597
  %v2795 = vmul.f32 %v2459, %v2602
  %v2796 = vmul.f32 %v2460, %v2607
  %v2797 = vmul.f32 %v2461, %v2612
  %v2798 = vmul.f32 %v2462, %v2617
  %v2799 = vmul.f32 %v2463, %v2622
  %v2800 = vmul.f32 %v2464, %v2627
  %v2801 = vmul.f32 %v2465, %v2632
  %v2802 = vmul.f32 %v2466, %v2637
  %v2803 = vmul.f32 %v2467, %v2642
  %v2804 = vmul.f32 %v2468, %v2647
  %v2805 = vmul.f32 %v2469, %v2652
  %v2806 = vmul.f32 %v2470, %v2657
  %v2807 = vmul.f32 %v2471, %v2662
  %v2808 = vmul.f32 %v2472, %v2667
  %v2809 = vmul.f32 %v2473, %v2672
  %v2810 = vmul.f32 %v2474, %v2677
  %v2811 = vmul.f32 %v2475, %v2682
  %v2812 = vmul.f32 %v2476, %v2687
  %v2813 = vmul.f32 %v2477, %v2692
  %v2814 = vmul.f32 %v2478, %v2697
  %v2815 = vmul.f32 %v2479, %v2702
  %v2816 = vmul.f32 %v2480, %v2707
  %v2817 = vmul.f32 %v2481, %v2712
  %v2818 = vmul.f32 %v2482, %v2717
  %v2819 = vmul.f32 %v2483, %v2722
  %v2820 = vmul.f32 %v2484, %v2727
  %v2821 = vmul.f32 %v2485, %v2732
  %v2822 = vmul.f32 %v2486, %v2737
  %v2823 = vmul.f32 %v2487, %v2742
  %v2824 = vmul.f32 %v2488, %v2747
  %v2825 = vmul.f32 %v2489, %v2752
  %v2826 = vmul.f32 %v2490, %v2757
  %v2827 = vmul.f32 %v2491, %v2762
  %v2828 = vmul.f32 %v2492, %v2767
  %v2829 = vmul.f32 %v2493, %v2772
  %v2830 = vmul.f32 %v2494, %v2777
  %v2831 = vmul.f32 %v2495, %v2782
  %vm2832 = vcmask 195584
  %v2833 = vsel %vm2832, %v2784, 0.0
  %v2834 = vsel %vm2832, %v2785, 0.0
  %v2835 = vadd.f32 %v2833, %v2834
  %v2836 = vsel %vm2832, %v2786, 0.0
  %v2837 = vadd.f32 %v2835, %v2836
  %v2838 = vsel %vm2832, %v2787, 0.0
  %v2839 = vadd.f32 %v2837, %v2838
  %v2840 = vsel %vm2832, %v2788, 0.0
  %v2841 = vadd.f32 %v2839, %v2840
  %v2842 = vsel %vm2832, %v2789, 0.0
  %v2843 = vadd.f32 %v2841, %v2842
  %v2844 = vsel %vm2832, %v2790, 0.0
  %v2845 = vadd.f32 %v2843, %v2844
  %v2846 = vsel %vm2832, %v2791, 0.0
  %v2847 = vadd.f32 %v2845, %v2846
  %v2848 = vsel %vm2832, %v2792, 0.0
  %v2849 = vadd.f32 %v2847, %v2848
  %v2850 = vsel %vm2832, %v2793, 0.0
  %v2851 = vadd.f32 %v2849, %v2850
  %v2852 = vsel %vm2832, %v2794, 0.0
  %v2853 = vadd.f32 %v2851, %v2852
  %v2854 = vsel %vm2832, %v2795, 0.0
  %v2855 = vadd.f32 %v2853, %v2854
  %v2856 = vsel %vm2832, %v2796, 0.0
  %v2857 = vadd.f32 %v2855, %v2856
  %v2858 = vsel %vm2832, %v2797, 0.0
  %v2859 = vadd.f32 %v2857, %v2858
  %v2860 = vsel %vm2832, %v2798, 0.0
  %v2861 = vadd.f32 %v2859, %v2860
  %v2862 = vsel %vm2832, %v2799, 0.0
  %v2863 = vadd.f32 %v2861, %v2862
  %v2864 = vsel %vm2832, %v2800, 0.0
  %v2865 = vadd.f32 %v2863, %v2864
  %v2866 = vsel %vm2832, %v2801, 0.0
  %v2867 = vadd.f32 %v2865, %v2866
  %v2868 = vsel %vm2832, %v2802, 0.0
  %v2869 = vadd.f32 %v2867, %v2868
  %v2870 = vsel %vm2832, %v2803, 0.0
  %v2871 = vadd.f32 %v2869, %v2870
  %v2872 = vsel %vm2832, %v2804, 0.0
  %v2873 = vadd.f32 %v2871, %v2872
  %v2874 = vsel %vm2832, %v2805, 0.0
  %v2875 = vadd.f32 %v2873, %v2874
  %v2876 = vsel %vm2832, %v2806, 0.0
  %v2877 = vadd.f32 %v2875, %v2876
  %v2878 = vsel %vm2832, %v2807, 0.0
  %v2879 = vadd.f32 %v2877, %v2878
  %v2880 = vsel %vm2832, %v2808, 0.0
  %v2881 = vadd.f32 %v2879, %v2880
  %v2882 = vsel %vm2832, %v2809, 0.0
  %v2883 = vadd.f32 %v2881, %v2882
  %v2884 = vsel %vm2832, %v2810, 0.0
  %v2885 = vadd.f32 %v2883, %v2884
  %v2886 = vsel %vm2832, %v2811, 0.0
  %v2887 = vadd.f32 %v2885, %v2886
  %v2888 = vsel %vm2832, %v2812, 0.0
  %v2889 = vadd.f32 %v2887, %v2888
  %v2890 = vsel %vm2832, %v2813, 0.0
  %v2891 = vadd.f32 %v2889, %v2890
  %v2892 = vsel %vm2832, %v2814, 0.0
  %v2893 = vadd.f32 %v2891, %v2892
  %v2894 = vsel %vm2832, %v2815, 0.0
  %v2895 = vadd.f32 %v2893, %v2894
  %v2896 = vsel %vm2832, %v2816, 0.0
  %v2897 = vadd.f32 %v2895, %v2896
  %v2898 = vsel %vm2832, %v2817, 0.0
  %v2899 = vadd.f32 %v2897, %v2898
  %v2900 = vsel %vm2832, %v2818, 0.0
  %v2901 = vadd.f32 %v2899, %v2900
  %v2902 = vsel %vm2832, %v2819, 0.0
  %v2903 = vadd.f32 %v2901, %v2902
  %v2904 = vsel %vm2832, %v2820, 0.0
  %v2905 = vadd.f32 %v2903, %v2904
  %v2906 = vsel %vm2832, %v2821, 0.0
  %v2907 = vadd.f32 %v2905, %v2906
  %v2908 = vsel %vm2832, %v2822, 0.0
  %v2909 = vadd.f32 %v2907, %v2908
  %v2910 = vsel %vm2832, %v2823, 0.0
  %v2911 = vadd.f32 %v2909, %v2910
  %v2912 = vsel %vm2832, %v2824, 0.0
  %v2913 = vadd.f32 %v2911, %v2912
  %v2914 = vsel %vm2832, %v2825, 0.0
  %v2915 = vadd.f32 %v2913, %v2914
  %v2916 = vsel %vm2832, %v2826, 0.0
  %v2917 = vadd.f32 %v2915, %v2916
  %v2918 = vsel %vm2832, %v2827, 0.0
  %v2919 = vadd.f32 %v2917, %v2918
  %v2920 = vsel %vm2832, %v2828, 0.0
  %v2921 = vadd.f32 %v2919, %v2920
  %v2922 = vsel %vm2832, %v2829, 0.0
  %v2923 = vadd.f32 %v2921, %v2922
  %v2924 = vsel %vm2832, %v2830, 0.0
  %v2925 = vadd.f32 %v2923, %v2924
  %v2926 = vsel %vm2832, %v2831, 0.0
  %v2927 = vadd.f32 %v2925, %v2926
  %v2928 = vrot.slane %v2927, 4
  %v2929 = vadd.f32 %v2927, %v2928
  %v2930 = vrot.slane %v2929, 2
  %v2931 = vadd.f32 %v2929, %v2930
  %v2932 = vrot.slane %v2931, 1
  %v2933 = vadd.f32 %v2931, %v2932
  %s2934 = sld [smem:[#allocation2]]
  %v2935 = vstv %s2934
  %v2936 = vadd.f32 %v2933, %v2935
  %vm2937 = vcmask 188416
  %2938 = vst.msk [vmem:[%s7] sm:$0x1] %vm2937, %v2936
  // Predicated region
  $region30: #{compute_v_hat.1} parent=0 // pred_check
    _
  $region31: #{compute_v_hat.1} parent=0 // pred_check_branch
    %2940 = sbr.rel (0) target = $region33
  $region32: #{compute_v_hat.1} parent=0 // pred_region
    _
  $region33: #{compute_v_hat.1} parent=0 // pred_fallthru
    _
  // Predicated region
  $region34: #{compute_v_hat.1} parent=0 // pred_check
    _
  $region35: #{compute_v_hat.1} parent=0 // pred_check_branch
    %2942 = sbr.rel (0) target = $region37
  $region36: #{compute_v_hat.1} parent=0 // pred_region
    _
  $region37: #{compute_v_hat.1} parent=0 // pred_fallthru
    _

</llo_original>
